<compile_context>
chip_gen: v7x
topology: tpu7x:2x2x1
jax: 0.10.0
libtpu: 0.0.40
codegen_flags: <defaults>
</compile_context>

<pallas_src>
import functools

import numpy as np
import jax
import jax.numpy as jnp
from jax.experimental import pallas as pl
from jax.experimental.pallas import tpu as pltpu


# ----------------------------------------------------------------------------
# Fused kernel: one grid step per Bb-image block, lane-dense (.., C, H*W).
# ----------------------------------------------------------------------------
def _lca11_kernel(x_ref, pred_ref, lca_ref, w1t_ref, w2t_ref, u_ref, wop_ref,
                  sab_ref, out_ref, *, bb, C):
    x = x_ref[0]                                         # (Bb, C, HW) f32
    HW = x.shape[-1]

    # ---- Channel attention: per-image max/avg pool -> shared 2-layer MLP ----
    maxp = jnp.max(x, axis=2)                            # (Bb, C)
    avgp = jnp.mean(x, axis=2)                           # (Bb, C)
    pooled = jnp.concatenate([maxp, avgp], axis=0)       # (2*Bb, C)
    h1 = jnp.maximum(
        jnp.dot(pooled, w1t_ref[...], preferred_element_type=jnp.float32), 0.0)
    o2 = jnp.dot(h1, w2t_ref[...],
                 preferred_element_type=jnp.float32)     # (2*Bb, C)
    ca = jax.nn.sigmoid(o2[:bb] + o2[bb:])               # (Bb, C)
    x_ca = x * ca[:, :, None]

    # ---- Gate: att = 1 - |sigmoid(pred) - 0.5| / 0.5 ----
    score = jax.nn.sigmoid(pred_ref[0])                  # (Bb, HW)
    gate = 1.0 - 2.0 * jnp.abs(score - 0.5)
    att_x = x_ca * gate[:, None, :]

    # ---- lca bilinear 2x upsample: one bf16 MXU matmul ----
    lca_b = lca_ref[0].astype(jnp.bfloat16)              # (Bb*C, hw)
    lca_up = jnp.dot(lca_b, u_ref[...],
                     preferred_element_type=jnp.float32)  # (Bb*C, HW)
    y = att_x + lca_up.reshape(bb, C, HW)                # (Bb, C, HW)

    # ---- Spatial attention: [max_c | mean_c] @ banded 7x7-conv operator ----
    mx = jnp.max(y, axis=1)                              # (Bb, HW)
    mn = jnp.mean(y, axis=1)                             # (Bb, HW)
    conv_in = jnp.concatenate([mx, mn], axis=1)          # (Bb, 2*HW)
    conv = jnp.dot(conv_in, wop_ref[...],
                   preferred_element_type=jnp.float32) + sab_ref[0]
    sa = jax.nn.sigmoid(conv)                            # (Bb, HW)

    # ---- out = y * sa + residual ----
    out_ref[0] = y * sa[:, None, :] + x


def _bilinear_up2_matrix(n):
    """1-D bilinear 2x upsample matrix matching torch.nn.Upsample(scale=2,
    mode='bilinear', align_corners=False)."""
    m = np.zeros((2 * n, n), dtype=np.float32)
    for k in range(n):
        if k == 0:
            m[0, 0] = 1.0
        else:
            m[2 * k, k - 1] = 0.25
            m[2 * k, k] = 0.75
        if k == n - 1:
            m[2 * k + 1, k] = 1.0
        else:
            m[2 * k + 1, k] = 0.75
            m[2 * k + 1, k + 1] = 0.25
    return m


def _conv7x7_band_index(H, W):
    """Compile-time constants: flat-index and validity mask so that the 7x7
    same-padded conv over a 2-channel (max,mean) map becomes one matmul with a
    (2*HW, HW) banded operator gathered from the 98 conv weights."""
    HW = H * W
    p = np.arange(HW)
    py, px = p // W, p % W
    ky = py[:, None] - py[None, :] + 3                   # (HW, HW)
    kx = px[:, None] - px[None, :] + 3
    valid = (ky >= 0) & (ky < 7) & (kx >= 0) & (kx < 7)
    tap = np.where(valid, ky * 7 + kx, 0).astype(np.int32)
    idx = np.concatenate([tap, tap + 49], axis=0)        # (2*HW, HW) into (98,)
    mask = np.concatenate([valid, valid], axis=0).astype(np.float32)
    return idx, mask


def _pick_block_b(B, max_bb=8):
    """Largest per-step batch that divides B, keeps >= 2 grid steps when
    possible (so v7x megacore sharding has work on both cores), capped at 8."""
    target_grid = 2 if B >= 2 else 1
    best = 1
    for bb in range(1, min(B, max_bb) + 1):
        if B % bb == 0 and B // bb >= target_grid:
            best = bb
    return best


def lca11_forward(x, pred, lca_down, w1, w2, saw, sab):
    B, C, H, W = x.shape
    h, w = lca_down.shape[2], lca_down.shape[3]
    HW, hw = H * W, h * w
    Cr = w1.shape[0]
    bb = _pick_block_b(B)
    G = B // bb

    # Bilinear 2x upsample operator on flattened pixels, bf16 (weights exact).
    # TODO(synk): at much larger feature maps switch to the separable
    # row/col two-matmul form and tile HW (v7x 64 MiB VMEM hits first).
    U = jnp.asarray(
        np.kron(_bilinear_up2_matrix(h), _bilinear_up2_matrix(w)).T
    ).astype(jnp.bfloat16)                               # (hw, HW)

    # Banded 7x7-conv operator (zero padding baked in), gathered from the
    # 98 conv weights at trace time.  Kept f32 for accuracy.
    idx, mask = _conv7x7_band_index(H, W)
    Wop = jnp.take(saw.reshape(-1), jnp.asarray(idx)) * jnp.asarray(mask)

    # Pre-transposed MLP weights so the kernel does row-major (N, C) matmuls.
    w1t = jnp.transpose(w1)                              # (C, Cr)
    w2t = jnp.transpose(w2)                              # (Cr, C)

    # Free contiguous reshapes to the Bb-batched lane-dense layout.
    x4 = x.reshape(G, bb, C, HW)
    pred3 = pred.reshape(G, bb, HW)
    lca3 = lca_down.reshape(G, bb * C, hw)

    kernel = functools.partial(_lca11_kernel, bb=bb, C=C)

    out = pl.pallas_call(
        kernel,
        out_shape=jax.ShapeDtypeStruct((G, bb, C, HW), jnp.float32),
        grid_spec=pltpu.PrefetchScalarGridSpec(
            num_scalar_prefetch=0,
            grid=(G,),
            in_specs=[
                pl.BlockSpec((1, bb, C, HW), lambda g: (g, 0, 0, 0)),    # x
                pl.BlockSpec((1, bb, HW), lambda g: (g, 0, 0)),          # pred
                pl.BlockSpec((1, bb * C, hw), lambda g: (g, 0, 0)),      # lca_down
                pl.BlockSpec((C, Cr), lambda g: (0, 0)),                 # ca.se[0]^T
                pl.BlockSpec((Cr, C), lambda g: (0, 0)),                 # ca.se[2]^T
                pl.BlockSpec((hw, HW), lambda g: (0, 0)),                # upsample op
                pl.BlockSpec((2 * HW, HW), lambda g: (0, 0)),            # conv operator
                pl.BlockSpec(memory_space=pltpu.MemorySpace.SMEM),       # conv bias
            ],
            out_specs=pl.BlockSpec((1, bb, C, HW), lambda g: (g, 0, 0, 0)),
        ),
        compiler_params=pltpu.CompilerParams(
            dimension_semantics=("parallel",)),
    )(x4, pred3, lca3, w1t, w2t, U, Wop, sab)
    return out.reshape(B, C, H, W)


# ----------------------------------------------------------------------------
# Pure-JAX reference (same math, standard XLA ops) for a correctness check.
# ----------------------------------------------------------------------------
def lca11_reference(x, pred, lca_down, w1, w2, saw, sab):
    hi = jax.lax.Precision.HIGHEST
    maxp = jnp.max(x, axis=(2, 3))
    avgp = jnp.mean(x, axis=(2, 3))

    def se(v):
        h1 = jnp.maximum(jnp.einsum('bc,oc->bo', v, w1, precision=hi), 0.0)
        return jnp.einsum('bo,co->bc', h1, w2, precision=hi)

    ca = jax.nn.sigmoid(se(maxp) + se(avgp))[:, :, None, None]
    x_ca = x * ca
    att = 1.0 - jnp.abs(jax.nn.sigmoid(pred) - 0.5) / 0.5
    att_x = x_ca * att

    R = jnp.asarray(_bilinear_up2_matrix(lca_down.shape[2]))
    S = jnp.asarray(_bilinear_up2_matrix(lca_down.shape[3]))
    lca_up = jnp.einsum('Yy,Xx,bcyx->bcYX', R, S, lca_down, precision=hi)

    y = att_x + lca_up
    mx = jnp.max(y, axis=1, keepdims=True)
    mn = jnp.mean(y, axis=1, keepdims=True)
    sa_in = jnp.concatenate([mx, mn], axis=1)
    conv = jax.lax.conv_general_dilated(
        sa_in, saw, (1, 1), ((3, 3), (3, 3)),
        dimension_numbers=('NCHW', 'OIHW', 'NCHW'), precision=hi)
    conv = conv + sab.reshape(1, 1, 1, 1)
    y = y * jax.nn.sigmoid(conv)
    return y + x


if __name__ == "__main__":
    # Small shapes consistent with LCA11: channel=32, reduction=16, lca at
    # half resolution with the same channel count.  B=4 exercises Bb=2, grid=2.
    B, C, H, W = 4, 32, 16, 16
    reduction = 16
    Cr = C // reduction
    h, w = H // 2, W // 2

    key = jax.random.PRNGKey(0)
    ks = jax.random.split(key, 7)
    x = jax.random.normal(ks[0], (B, C, H, W), jnp.float32)
    pred = jax.random.normal(ks[1], (B, 1, H, W), jnp.float32)
    lca_down = jax.random.normal(ks[2], (B, C, h, w), jnp.float32)

    # Deterministic synthetic parameters (shapes from the module __init__).
    w1 = jax.random.normal(ks[3], (Cr, C), jnp.float32) * 0.1        # ca.se[0] weight (out,in)
    w2 = jax.random.normal(ks[4], (C, Cr), jnp.float32) * 0.1        # ca.se[2] weight (out,in)
    saw = jax.random.normal(ks[5], (1, 2, 7, 7), jnp.float32) * 0.1  # sa.conv weight
    sab = jax.random.normal(ks[6], (1,), jnp.float32) * 0.1          # sa.conv bias

    fwd = jax.jit(lca11_forward)
    y = jax.block_until_ready(fwd(x, pred, lca_down, w1, w2, saw, sab))

    y_ref = jax.block_until_ready(
        jax.jit(lca11_reference)(x, pred, lca_down, w1, w2, saw, sab))

    assert y.shape == (B, C, H, W)
    np.testing.assert_allclose(np.asarray(y), np.asarray(y_ref),
                               rtol=2e-2, atol=2e-2)
    print("KERNEL_OK")
</pallas_src>

<mosaic_0001>
module attributes {stable_mosaic.version = 11 : i64} {
  func.func @_lca11_kernel(%arg0: i32, %arg1: memref<1x2x32x256xf32, #tpu.memory_space<vmem>>, %arg2: memref<1x2x256xf32, #tpu.memory_space<vmem>>, %arg3: memref<1x64x64xf32, #tpu.memory_space<vmem>>, %arg4: memref<32x2xf32, #tpu.memory_space<vmem>>, %arg5: memref<2x32xf32, #tpu.memory_space<vmem>>, %arg6: memref<64x256xbf16, #tpu.memory_space<vmem>>, %arg7: memref<512x256xf32, #tpu.memory_space<vmem>>, %arg8: memref<1xf32, #tpu.memory_space<smem>>, %arg9: memref<1x2x32x256xf32, #tpu.memory_space<vmem>>) attributes {dimension_semantics = [#tpu.dimension_semantics<parallel>], iteration_bounds = array<i64: 2>, scalar_prefetch = 0 : i64, scratch_operands = 0 : i64, tpu.core_type = #tpu.core_type<tc>, window_params = [{transform_indices = @transform_0, window_bounds = array<i64: 1, 2, 32, 256>}, {transform_indices = @transform_1, window_bounds = array<i64: 1, 2, 256>}, {transform_indices = @transform_2, window_bounds = array<i64: 1, 64, 64>}, {pipeline_mode = #tpu.pipeline_mode<synchronous>, transform_indices = @transform_3, window_bounds = array<i64: 32, 2>}, {pipeline_mode = #tpu.pipeline_mode<synchronous>, transform_indices = @transform_4, window_bounds = array<i64: 2, 32>}, {pipeline_mode = #tpu.pipeline_mode<synchronous>, transform_indices = @transform_5, window_bounds = array<i64: 64, 256>}, {pipeline_mode = #tpu.pipeline_mode<synchronous>, transform_indices = @transform_6, window_bounds = array<i64: 512, 256>}, {transform_indices = @transform_7, window_bounds = array<i64: 1>}, {transform_indices = @transform_8, window_bounds = array<i64: 1, 2, 32, 256>}]} {
    %c0 = arith.constant 0 : index
    %c0_0 = arith.constant 0 : index
    %c0_1 = arith.constant 0 : index
    %c0_2 = arith.constant 0 : index
    %0 = vector.load %arg1[%c0, %c0_0, %c0_1, %c0_2] : memref<1x2x32x256xf32, #tpu.memory_space<vmem>>, vector<1x2x32x256xf32>
    %1 = vector.shape_cast %0 : vector<1x2x32x256xf32> to vector<2x32x256xf32>
    %cst = arith.constant dense<0xFF800000> : vector<2x32xf32>
    %2 = vector.multi_reduction <maximumf>, %1, %cst [2] : vector<2x32x256xf32> to vector<2x32xf32>
    %cst_3 = arith.constant dense<0.000000e+00> : vector<2x32xf32>
    %3 = vector.multi_reduction <add>, %1, %cst_3 [2] : vector<2x32x256xf32> to vector<2x32xf32>
    %cst_4 = arith.constant 2.560000e+02 : f32
    %4 = vector.broadcast %cst_4 : f32 to vector<2x32xf32>
    %5 = arith.divf %3, %4 : vector<2x32xf32>
    %6 = tpu.concatenate %2, %5 in 0 : vector<2x32xf32>, vector<2x32xf32> -> vector<4x32xf32>
    %c0_5 = arith.constant 0 : index
    %c0_6 = arith.constant 0 : index
    %7 = vector.load %arg4[%c0_5, %c0_6] : memref<32x2xf32, #tpu.memory_space<vmem>>, vector<32x2xf32>
    %cst_7 = arith.constant dense<0.000000e+00> : vector<4x2xf32>
    %8 = tpu.matmul %6, %7, %cst_7 {dimension_numbers = #tpu.dot_dimension_numbers<[1], [0], [0], [1], [0, 0, 1, 1], [], []>} : vector<4x32xf32>, vector<32x2xf32>, vector<4x2xf32> -> vector<4x2xf32>
    %cst_8 = arith.constant 0.000000e+00 : f32
    %9 = vector.broadcast %cst_8 : f32 to vector<4x2xf32>
    %10 = arith.maximumf %8, %9 : vector<4x2xf32>
    %c0_9 = arith.constant 0 : index
    %c0_10 = arith.constant 0 : index
    %11 = vector.load %arg5[%c0_9, %c0_10] : memref<2x32xf32, #tpu.memory_space<vmem>>, vector<2x32xf32>
    %cst_11 = arith.constant dense<0.000000e+00> : vector<4x32xf32>
    %12 = tpu.matmul %10, %11, %cst_11 {dimension_numbers = #tpu.dot_dimension_numbers<[1], [0], [0], [1], [0, 0, 1, 1], [], []>} : vector<4x2xf32>, vector<2x32xf32>, vector<4x32xf32> -> vector<4x32xf32>
    %13 = vector.extract_strided_slice %12 {offsets = [0, 0], sizes = [2, 32], strides = [1, 1]} : vector<4x32xf32> to vector<2x32xf32>
    %14 = vector.extract_strided_slice %12 {offsets = [2, 0], sizes = [2, 32], strides = [1, 1]} : vector<4x32xf32> to vector<2x32xf32>
    %15 = arith.addf %13, %14 : vector<2x32xf32>
    %16 = arith.negf %15 : vector<2x32xf32>
    %17 = math.exp %16 : vector<2x32xf32>
    %cst_12 = arith.constant 1.000000e+00 : f32
    %18 = vector.broadcast %cst_12 : f32 to vector<2x32xf32>
    %19 = arith.addf %18, %17 : vector<2x32xf32>
    %20 = arith.divf %18, %19 : vector<2x32xf32>
    %21 = vector.shape_cast %20 : vector<2x32xf32> to vector<2x32x1xf32>
    %22 = vector.broadcast %21 : vector<2x32x1xf32> to vector<2x32x256xf32>
    %23 = arith.mulf %1, %22 : vector<2x32x256xf32>
    %c0_13 = arith.constant 0 : index
    %c0_14 = arith.constant 0 : index
    %c0_15 = arith.constant 0 : index
    %24 = vector.load %arg2[%c0_13, %c0_14, %c0_15] : memref<1x2x256xf32, #tpu.memory_space<vmem>>, vector<1x2x256xf32>
    %25 = vector.shape_cast %24 : vector<1x2x256xf32> to vector<2x256xf32>
    %26 = arith.negf %25 : vector<2x256xf32>
    %27 = math.exp %26 : vector<2x256xf32>
    %cst_16 = arith.constant 1.000000e+00 : f32
    %28 = vector.broadcast %cst_16 : f32 to vector<2x256xf32>
    %29 = arith.addf %28, %27 : vector<2x256xf32>
    %30 = arith.divf %28, %29 : vector<2x256xf32>
    %cst_17 = arith.constant 5.000000e-01 : f32
    %31 = vector.broadcast %cst_17 : f32 to vector<2x256xf32>
    %32 = arith.subf %30, %31 : vector<2x256xf32>
    %33 = math.absf %32 : vector<2x256xf32>
    %cst_18 = arith.constant 2.000000e+00 : f32
    %34 = vector.broadcast %cst_18 : f32 to vector<2x256xf32>
    %35 = arith.mulf %34, %33 : vector<2x256xf32>
    %cst_19 = arith.constant 1.000000e+00 : f32
    %36 = vector.broadcast %cst_19 : f32 to vector<2x256xf32>
    %37 = arith.subf %36, %35 : vector<2x256xf32>
    %38 = vector.shape_cast %37 : vector<2x256xf32> to vector<2x1x256xf32>
    %39 = vector.broadcast %38 : vector<2x1x256xf32> to vector<2x32x256xf32>
    %40 = arith.mulf %23, %39 : vector<2x32x256xf32>
    %c0_20 = arith.constant 0 : index
    %c0_21 = arith.constant 0 : index
    %c0_22 = arith.constant 0 : index
    %41 = vector.load %arg3[%c0_20, %c0_21, %c0_22] : memref<1x64x64xf32, #tpu.memory_space<vmem>>, vector<1x64x64xf32>
    %42 = vector.shape_cast %41 : vector<1x64x64xf32> to vector<64x64xf32>
    %43 = arith.truncf %42 : vector<64x64xf32> to vector<64x64xbf16>
    %c0_23 = arith.constant 0 : index
    %c0_24 = arith.constant 0 : index
    %44 = vector.load %arg6[%c0_23, %c0_24] : memref<64x256xbf16, #tpu.memory_space<vmem>>, vector<64x256xbf16>
    %cst_25 = arith.constant dense<0.000000e+00> : vector<64x256xf32>
    %45 = tpu.matmul %43, %44, %cst_25 {dimension_numbers = #tpu.dot_dimension_numbers<[1], [0], [0], [1], [0, 0, 1, 1], [], []>} : vector<64x64xbf16>, vector<64x256xbf16>, vector<64x256xf32> -> vector<64x256xf32>
    %46 = vector.shape_cast %45 : vector<64x256xf32> to vector<2x32x256xf32>
    %47 = arith.addf %40, %46 : vector<2x32x256xf32>
    %cst_26 = arith.constant dense<0xFF800000> : vector<2x256xf32>
    %48 = vector.multi_reduction <maximumf>, %47, %cst_26 [1] : vector<2x32x256xf32> to vector<2x256xf32>
    %cst_27 = arith.constant dense<0.000000e+00> : vector<2x256xf32>
    %49 = vector.multi_reduction <add>, %47, %cst_27 [1] : vector<2x32x256xf32> to vector<2x256xf32>
    %cst_28 = arith.constant 3.200000e+01 : f32
    %50 = vector.broadcast %cst_28 : f32 to vector<2x256xf32>
    %51 = arith.divf %49, %50 : vector<2x256xf32>
    %52 = tpu.concatenate %48, %51 in 1 : vector<2x256xf32>, vector<2x256xf32> -> vector<2x512xf32>
    %c0_29 = arith.constant 0 : index
    %c0_30 = arith.constant 0 : index
    %53 = vector.load %arg7[%c0_29, %c0_30] : memref<512x256xf32, #tpu.memory_space<vmem>>, vector<512x256xf32>
    %cst_31 = arith.constant dense<0.000000e+00> : vector<2x256xf32>
    %54 = tpu.matmul %52, %53, %cst_31 {dimension_numbers = #tpu.dot_dimension_numbers<[1], [0], [0], [1], [0, 0, 1, 1], [], []>} : vector<2x512xf32>, vector<512x256xf32>, vector<2x256xf32> -> vector<2x256xf32>
    %c0_32 = arith.constant 0 : index
    %55 = memref.load %arg8[%c0_32] : memref<1xf32, #tpu.memory_space<smem>>
    %56 = vector.broadcast %55 : f32 to vector<2x256xf32>
    %57 = arith.addf %54, %56 : vector<2x256xf32>
    %58 = arith.negf %57 : vector<2x256xf32>
    %59 = math.exp %58 : vector<2x256xf32>
    %cst_33 = arith.constant 1.000000e+00 : f32
    %60 = vector.broadcast %cst_33 : f32 to vector<2x256xf32>
    %61 = arith.addf %60, %59 : vector<2x256xf32>
    %62 = arith.divf %60, %61 : vector<2x256xf32>
    %63 = vector.shape_cast %62 : vector<2x256xf32> to vector<2x1x256xf32>
    %64 = vector.broadcast %63 : vector<2x1x256xf32> to vector<2x32x256xf32>
    %65 = arith.mulf %47, %64 : vector<2x32x256xf32>
    %66 = arith.addf %65, %1 : vector<2x32x256xf32>
    %c0_34 = arith.constant 0 : index
    %c0_35 = arith.constant 0 : index
    %c0_36 = arith.constant 0 : index
    %c0_37 = arith.constant 0 : index
    %67 = vector.load %arg9[%c0_34, %c0_35, %c0_36, %c0_37] : memref<1x2x32x256xf32, #tpu.memory_space<vmem>>, vector<1x2x32x256xf32>
    %68 = vector.shape_cast %67 : vector<1x2x32x256xf32> to vector<2x32x256xf32>
    %69 = vector.shape_cast %66 : vector<2x32x256xf32> to vector<1x2x32x256xf32>
    tpu.vector_store %arg9[%c0_34, %c0_35, %c0_36, %c0_37], %69 {strides = array<i32>} : memref<1x2x32x256xf32, #tpu.memory_space<vmem>>, vector<1x2x32x256xf32>,
    return
  }
  func.func @transform_0(%arg0: i32) -> (i32, i32, i32, i32) {
    %c0_i32 = arith.constant 0 : i32
    %c0_i32_0 = arith.constant 0 : i32
    %c0_i32_1 = arith.constant 0 : i32
    %c0_i32_2 = arith.constant 0 : i32
    return %arg0, %c0_i32, %c0_i32_0, %c0_i32_1 : i32, i32, i32, i32
  }
  func.func @transform_1(%arg0: i32) -> (i32, i32, i32) {
    %c0_i32 = arith.constant 0 : i32
    %c0_i32_0 = arith.constant 0 : i32
    %c0_i32_1 = arith.constant 0 : i32
    return %arg0, %c0_i32, %c0_i32_0 : i32, i32, i32
  }
  func.func @transform_2(%arg0: i32) -> (i32, i32, i32) {
    %c0_i32 = arith.constant 0 : i32
    %c0_i32_0 = arith.constant 0 : i32
    %c0_i32_1 = arith.constant 0 : i32
    return %arg0, %c0_i32, %c0_i32_0 : i32, i32, i32
  }
  func.func @transform_3(%arg0: i32) -> (i32, i32) {
    %c0_i32 = arith.constant 0 : i32
    %c0_i32_0 = arith.constant 0 : i32
    %c0_i32_1 = arith.constant 0 : i32
    return %c0_i32, %c0_i32_0 : i32, i32
  }
  func.func @transform_4(%arg0: i32) -> (i32, i32) {
    %c0_i32 = arith.constant 0 : i32
    %c0_i32_0 = arith.constant 0 : i32
    %c0_i32_1 = arith.constant 0 : i32
    return %c0_i32, %c0_i32_0 : i32, i32
  }
  func.func @transform_5(%arg0: i32) -> (i32, i32) {
    %c0_i32 = arith.constant 0 : i32
    %c0_i32_0 = arith.constant 0 : i32
    %c0_i32_1 = arith.constant 0 : i32
    return %c0_i32, %c0_i32_0 : i32, i32
  }
  func.func @transform_6(%arg0: i32) -> (i32, i32) {
    %c0_i32 = arith.constant 0 : i32
    %c0_i32_0 = arith.constant 0 : i32
    %c0_i32_1 = arith.constant 0 : i32
    return %c0_i32, %c0_i32_0 : i32, i32
  }
  func.func @transform_7(%arg0: i32) -> i32 {
    %c0_i32 = arith.constant 0 : i32
    %c0_i32_0 = arith.constant 0 : i32
    return %c0_i32 : i32
  }
  func.func @transform_8(%arg0: i32) -> (i32, i32, i32, i32) {
    %c0_i32 = arith.constant 0 : i32
    %c0_i32_0 = arith.constant 0 : i32
    %c0_i32_1 = arith.constant 0 : i32
    %c0_i32_2 = arith.constant 0 : i32
    return %arg0, %c0_i32, %c0_i32_0, %c0_i32_1 : i32, i32, i32, i32
  }
}

</mosaic_0001>

<llo_original>
// kernel: mul.0
$region0: #{mul.0}
  #allocation0 [shape = 's32[1]{0}', space=sflag, size = 0x4, scoped, tag = 'scoped memory for mul.0']
  %s0 = inlined_call_operand.vmem [shape: f32[131072], index: 0, kind: input, shape index: {}]
  %s1 = inlined_call_operand.vmem [shape: f32[131072], index: 1, kind: input, shape index: {}]
  %s2 = inlined_call_operand.vmem [shape: f32[131072], index: 2, kind: output, shape index: {}]
  %v3 = vld [vmem:[%s0] sm:$0xff]
  %v4 = vld [vmem:[%s1] sm:$0xff]
  %5 = xla_tuple %v3, %v4
  %6 = xla_tuple %5
  %v7 = vmul.f32 %v3, %v4
  %8 = xla_tuple %v7
  %9 = vst [vmem:[%s2] sm:$0xff] %v7
  %s10 = scalar_lea.vmem %s0, 8
  %v11 = vld [vmem:[%s10] sm:$0xff]
  %s12 = scalar_lea.vmem %s1, 8
  %v13 = vld [vmem:[%s12] sm:$0xff]
  %14 = xla_tuple %v11, %v13
  %15 = xla_tuple %14
  %v16 = vmul.f32 %v11, %v13
  %17 = xla_tuple %v16
  %s18 = scalar_lea.vmem %s2, 8
  %19 = vst [vmem:[%s18] sm:$0xff] %v16
  %s20 = scalar_lea.vmem %s0, 16
  %v21 = vld [vmem:[%s20] sm:$0xff]
  %s22 = scalar_lea.vmem %s1, 16
  %v23 = vld [vmem:[%s22] sm:$0xff]
  %24 = xla_tuple %v21, %v23
  %25 = xla_tuple %24
  %v26 = vmul.f32 %v21, %v23
  %27 = xla_tuple %v26
  %s28 = scalar_lea.vmem %s2, 16
  %29 = vst [vmem:[%s28] sm:$0xff] %v26
  %s30 = scalar_lea.vmem %s0, 24
  %v31 = vld [vmem:[%s30] sm:$0xff]
  %s32 = scalar_lea.vmem %s1, 24
  %v33 = vld [vmem:[%s32] sm:$0xff]
  %34 = xla_tuple %v31, %v33
  %35 = xla_tuple %34
  %v36 = vmul.f32 %v31, %v33
  %37 = xla_tuple %v36
  %s38 = scalar_lea.vmem %s2, 24
  %39 = vst [vmem:[%s38] sm:$0xff] %v36
  %s40 = scalar_lea.vmem %s0, 32
  %v41 = vld [vmem:[%s40] sm:$0xff]
  %s42 = scalar_lea.vmem %s1, 32
  %v43 = vld [vmem:[%s42] sm:$0xff]
  %44 = xla_tuple %v41, %v43
  %45 = xla_tuple %44
  %v46 = vmul.f32 %v41, %v43
  %47 = xla_tuple %v46
  %s48 = scalar_lea.vmem %s2, 32
  %49 = vst [vmem:[%s48] sm:$0xff] %v46
  %s50 = scalar_lea.vmem %s0, 40
  %v51 = vld [vmem:[%s50] sm:$0xff]
  %s52 = scalar_lea.vmem %s1, 40
  %v53 = vld [vmem:[%s52] sm:$0xff]
  %54 = xla_tuple %v51, %v53
  %55 = xla_tuple %54
  %v56 = vmul.f32 %v51, %v53
  %57 = xla_tuple %v56
  %s58 = scalar_lea.vmem %s2, 40
  %59 = vst [vmem:[%s58] sm:$0xff] %v56
  %s60 = scalar_lea.vmem %s0, 48
  %v61 = vld [vmem:[%s60] sm:$0xff]
  %s62 = scalar_lea.vmem %s1, 48
  %v63 = vld [vmem:[%s62] sm:$0xff]
  %64 = xla_tuple %v61, %v63
  %65 = xla_tuple %64
  %v66 = vmul.f32 %v61, %v63
  %67 = xla_tuple %v66
  %s68 = scalar_lea.vmem %s2, 48
  %69 = vst [vmem:[%s68] sm:$0xff] %v66
  %s70 = scalar_lea.vmem %s0, 56
  %v71 = vld [vmem:[%s70] sm:$0xff]
  %s72 = scalar_lea.vmem %s1, 56
  %v73 = vld [vmem:[%s72] sm:$0xff]
  %74 = xla_tuple %v71, %v73
  %75 = xla_tuple %74
  %v76 = vmul.f32 %v71, %v73
  %77 = xla_tuple %v76
  %s78 = scalar_lea.vmem %s2, 56
  %79 = vst [vmem:[%s78] sm:$0xff] %v76
  %s80 = scalar_lea.vmem %s0, 64
  %v81 = vld [vmem:[%s80] sm:$0xff]
  %s82 = scalar_lea.vmem %s1, 64
  %v83 = vld [vmem:[%s82] sm:$0xff]
  %84 = xla_tuple %v81, %v83
  %85 = xla_tuple %84
  %v86 = vmul.f32 %v81, %v83
  %87 = xla_tuple %v86
  %s88 = scalar_lea.vmem %s2, 64
  %89 = vst [vmem:[%s88] sm:$0xff] %v86
  %s90 = scalar_lea.vmem %s0, 72
  %v91 = vld [vmem:[%s90] sm:$0xff]
  %s92 = scalar_lea.vmem %s1, 72
  %v93 = vld [vmem:[%s92] sm:$0xff]
  %94 = xla_tuple %v91, %v93
  %95 = xla_tuple %94
  %v96 = vmul.f32 %v91, %v93
  %97 = xla_tuple %v96
  %s98 = scalar_lea.vmem %s2, 72
  %99 = vst [vmem:[%s98] sm:$0xff] %v96
  %s100 = scalar_lea.vmem %s0, 80
  %v101 = vld [vmem:[%s100] sm:$0xff]
  %s102 = scalar_lea.vmem %s1, 80
  %v103 = vld [vmem:[%s102] sm:$0xff]
  %104 = xla_tuple %v101, %v103
  %105 = xla_tuple %104
  %v106 = vmul.f32 %v101, %v103
  %107 = xla_tuple %v106
  %s108 = scalar_lea.vmem %s2, 80
  %109 = vst [vmem:[%s108] sm:$0xff] %v106
  %s110 = scalar_lea.vmem %s0, 88
  %v111 = vld [vmem:[%s110] sm:$0xff]
  %s112 = scalar_lea.vmem %s1, 88
  %v113 = vld [vmem:[%s112] sm:$0xff]
  %114 = xla_tuple %v111, %v113
  %115 = xla_tuple %114
  %v116 = vmul.f32 %v111, %v113
  %117 = xla_tuple %v116
  %s118 = scalar_lea.vmem %s2, 88
  %119 = vst [vmem:[%s118] sm:$0xff] %v116
  %s120 = scalar_lea.vmem %s0, 96
  %v121 = vld [vmem:[%s120] sm:$0xff]
  %s122 = scalar_lea.vmem %s1, 96
  %v123 = vld [vmem:[%s122] sm:$0xff]
  %124 = xla_tuple %v121, %v123
  %125 = xla_tuple %124
  %v126 = vmul.f32 %v121, %v123
  %127 = xla_tuple %v126
  %s128 = scalar_lea.vmem %s2, 96
  %129 = vst [vmem:[%s128] sm:$0xff] %v126
  %s130 = scalar_lea.vmem %s0, 104
  %v131 = vld [vmem:[%s130] sm:$0xff]
  %s132 = scalar_lea.vmem %s1, 104
  %v133 = vld [vmem:[%s132] sm:$0xff]
  %134 = xla_tuple %v131, %v133
  %135 = xla_tuple %134
  %v136 = vmul.f32 %v131, %v133
  %137 = xla_tuple %v136
  %s138 = scalar_lea.vmem %s2, 104
  %139 = vst [vmem:[%s138] sm:$0xff] %v136
  %s140 = scalar_lea.vmem %s0, 112
  %v141 = vld [vmem:[%s140] sm:$0xff]
  %s142 = scalar_lea.vmem %s1, 112
  %v143 = vld [vmem:[%s142] sm:$0xff]
  %144 = xla_tuple %v141, %v143
  %145 = xla_tuple %144
  %v146 = vmul.f32 %v141, %v143
  %147 = xla_tuple %v146
  %s148 = scalar_lea.vmem %s2, 112
  %149 = vst [vmem:[%s148] sm:$0xff] %v146
  %s150 = scalar_lea.vmem %s0, 120
  %v151 = vld [vmem:[%s150] sm:$0xff]
  %s152 = scalar_lea.vmem %s1, 120
  %v153 = vld [vmem:[%s152] sm:$0xff]
  %154 = xla_tuple %v151, %v153
  %155 = xla_tuple %154
  %v156 = vmul.f32 %v151, %v153
  %157 = xla_tuple %v156
  %s158 = scalar_lea.vmem %s2, 120
  %159 = vst [vmem:[%s158] sm:$0xff] %v156
  %s160 = scalar_lea.vmem %s0, 128
  %v161 = vld [vmem:[%s160] sm:$0xff]
  %s162 = scalar_lea.vmem %s1, 128
  %v163 = vld [vmem:[%s162] sm:$0xff]
  %164 = xla_tuple %v161, %v163
  %165 = xla_tuple %164
  %v166 = vmul.f32 %v161, %v163
  %167 = xla_tuple %v166
  %s168 = scalar_lea.vmem %s2, 128
  %169 = vst [vmem:[%s168] sm:$0xff] %v166
  %s170 = scalar_lea.vmem %s0, 136
  %v171 = vld [vmem:[%s170] sm:$0xff]
  %s172 = scalar_lea.vmem %s1, 136
  %v173 = vld [vmem:[%s172] sm:$0xff]
  %174 = xla_tuple %v171, %v173
  %175 = xla_tuple %174
  %v176 = vmul.f32 %v171, %v173
  %177 = xla_tuple %v176
  %s178 = scalar_lea.vmem %s2, 136
  %179 = vst [vmem:[%s178] sm:$0xff] %v176
  %s180 = scalar_lea.vmem %s0, 144
  %v181 = vld [vmem:[%s180] sm:$0xff]
  %s182 = scalar_lea.vmem %s1, 144
  %v183 = vld [vmem:[%s182] sm:$0xff]
  %184 = xla_tuple %v181, %v183
  %185 = xla_tuple %184
  %v186 = vmul.f32 %v181, %v183
  %187 = xla_tuple %v186
  %s188 = scalar_lea.vmem %s2, 144
  %189 = vst [vmem:[%s188] sm:$0xff] %v186
  %s190 = scalar_lea.vmem %s0, 152
  %v191 = vld [vmem:[%s190] sm:$0xff]
  %s192 = scalar_lea.vmem %s1, 152
  %v193 = vld [vmem:[%s192] sm:$0xff]
  %194 = xla_tuple %v191, %v193
  %195 = xla_tuple %194
  %v196 = vmul.f32 %v191, %v193
  %197 = xla_tuple %v196
  %s198 = scalar_lea.vmem %s2, 152
  %199 = vst [vmem:[%s198] sm:$0xff] %v196
  %s200 = scalar_lea.vmem %s0, 160
  %v201 = vld [vmem:[%s200] sm:$0xff]
  %s202 = scalar_lea.vmem %s1, 160
  %v203 = vld [vmem:[%s202] sm:$0xff]
  %204 = xla_tuple %v201, %v203
  %205 = xla_tuple %204
  %v206 = vmul.f32 %v201, %v203
  %207 = xla_tuple %v206
  %s208 = scalar_lea.vmem %s2, 160
  %209 = vst [vmem:[%s208] sm:$0xff] %v206
  %s210 = scalar_lea.vmem %s0, 168
  %v211 = vld [vmem:[%s210] sm:$0xff]
  %s212 = scalar_lea.vmem %s1, 168
  %v213 = vld [vmem:[%s212] sm:$0xff]
  %214 = xla_tuple %v211, %v213
  %215 = xla_tuple %214
  %v216 = vmul.f32 %v211, %v213
  %217 = xla_tuple %v216
  %s218 = scalar_lea.vmem %s2, 168
  %219 = vst [vmem:[%s218] sm:$0xff] %v216
  %s220 = scalar_lea.vmem %s0, 176
  %v221 = vld [vmem:[%s220] sm:$0xff]
  %s222 = scalar_lea.vmem %s1, 176
  %v223 = vld [vmem:[%s222] sm:$0xff]
  %224 = xla_tuple %v221, %v223
  %225 = xla_tuple %224
  %v226 = vmul.f32 %v221, %v223
  %227 = xla_tuple %v226
  %s228 = scalar_lea.vmem %s2, 176
  %229 = vst [vmem:[%s228] sm:$0xff] %v226
  %s230 = scalar_lea.vmem %s0, 184
  %v231 = vld [vmem:[%s230] sm:$0xff]
  %s232 = scalar_lea.vmem %s1, 184
  %v233 = vld [vmem:[%s232] sm:$0xff]
  %234 = xla_tuple %v231, %v233
  %235 = xla_tuple %234
  %v236 = vmul.f32 %v231, %v233
  %237 = xla_tuple %v236
  %s238 = scalar_lea.vmem %s2, 184
  %239 = vst [vmem:[%s238] sm:$0xff] %v236
  %s240 = scalar_lea.vmem %s0, 192
  %v241 = vld [vmem:[%s240] sm:$0xff]
  %s242 = scalar_lea.vmem %s1, 192
  %v243 = vld [vmem:[%s242] sm:$0xff]
  %244 = xla_tuple %v241, %v243
  %245 = xla_tuple %244
  %v246 = vmul.f32 %v241, %v243
  %247 = xla_tuple %v246
  %s248 = scalar_lea.vmem %s2, 192
  %249 = vst [vmem:[%s248] sm:$0xff] %v246
  %s250 = scalar_lea.vmem %s0, 200
  %v251 = vld [vmem:[%s250] sm:$0xff]
  %s252 = scalar_lea.vmem %s1, 200
  %v253 = vld [vmem:[%s252] sm:$0xff]
  %254 = xla_tuple %v251, %v253
  %255 = xla_tuple %254
  %v256 = vmul.f32 %v251, %v253
  %257 = xla_tuple %v256
  %s258 = scalar_lea.vmem %s2, 200
  %259 = vst [vmem:[%s258] sm:$0xff] %v256
  %s260 = scalar_lea.vmem %s0, 208
  %v261 = vld [vmem:[%s260] sm:$0xff]
  %s262 = scalar_lea.vmem %s1, 208
  %v263 = vld [vmem:[%s262] sm:$0xff]
  %264 = xla_tuple %v261, %v263
  %265 = xla_tuple %264
  %v266 = vmul.f32 %v261, %v263
  %267 = xla_tuple %v266
  %s268 = scalar_lea.vmem %s2, 208
  %269 = vst [vmem:[%s268] sm:$0xff] %v266
  %s270 = scalar_lea.vmem %s0, 216
  %v271 = vld [vmem:[%s270] sm:$0xff]
  %s272 = scalar_lea.vmem %s1, 216
  %v273 = vld [vmem:[%s272] sm:$0xff]
  %274 = xla_tuple %v271, %v273
  %275 = xla_tuple %274
  %v276 = vmul.f32 %v271, %v273
  %277 = xla_tuple %v276
  %s278 = scalar_lea.vmem %s2, 216
  %279 = vst [vmem:[%s278] sm:$0xff] %v276
  %s280 = scalar_lea.vmem %s0, 224
  %v281 = vld [vmem:[%s280] sm:$0xff]
  %s282 = scalar_lea.vmem %s1, 224
  %v283 = vld [vmem:[%s282] sm:$0xff]
  %284 = xla_tuple %v281, %v283
  %285 = xla_tuple %284
  %v286 = vmul.f32 %v281, %v283
  %287 = xla_tuple %v286
  %s288 = scalar_lea.vmem %s2, 224
  %289 = vst [vmem:[%s288] sm:$0xff] %v286
  %s290 = scalar_lea.vmem %s0, 232
  %v291 = vld [vmem:[%s290] sm:$0xff]
  %s292 = scalar_lea.vmem %s1, 232
  %v293 = vld [vmem:[%s292] sm:$0xff]
  %294 = xla_tuple %v291, %v293
  %295 = xla_tuple %294
  %v296 = vmul.f32 %v291, %v293
  %297 = xla_tuple %v296
  %s298 = scalar_lea.vmem %s2, 232
  %299 = vst [vmem:[%s298] sm:$0xff] %v296
  %s300 = scalar_lea.vmem %s0, 240
  %v301 = vld [vmem:[%s300] sm:$0xff]
  %s302 = scalar_lea.vmem %s1, 240
  %v303 = vld [vmem:[%s302] sm:$0xff]
  %304 = xla_tuple %v301, %v303
  %305 = xla_tuple %304
  %v306 = vmul.f32 %v301, %v303
  %307 = xla_tuple %v306
  %s308 = scalar_lea.vmem %s2, 240
  %309 = vst [vmem:[%s308] sm:$0xff] %v306
  %s310 = scalar_lea.vmem %s0, 248
  %v311 = vld [vmem:[%s310] sm:$0xff]
  %s312 = scalar_lea.vmem %s1, 248
  %v313 = vld [vmem:[%s312] sm:$0xff]
  %314 = xla_tuple %v311, %v313
  %315 = xla_tuple %314
  %v316 = vmul.f32 %v311, %v313
  %317 = xla_tuple %v316
  %s318 = scalar_lea.vmem %s2, 248
  %319 = vst [vmem:[%s318] sm:$0xff] %v316
  %s320 = scalar_lea.vmem %s0, 256
  %v321 = vld [vmem:[%s320] sm:$0xff]
  %s322 = scalar_lea.vmem %s1, 256
  %v323 = vld [vmem:[%s322] sm:$0xff]
  %324 = xla_tuple %v321, %v323
  %325 = xla_tuple %324
  %v326 = vmul.f32 %v321, %v323
  %327 = xla_tuple %v326
  %s328 = scalar_lea.vmem %s2, 256
  %329 = vst [vmem:[%s328] sm:$0xff] %v326
  %s330 = scalar_lea.vmem %s0, 264
  %v331 = vld [vmem:[%s330] sm:$0xff]
  %s332 = scalar_lea.vmem %s1, 264
  %v333 = vld [vmem:[%s332] sm:$0xff]
  %334 = xla_tuple %v331, %v333
  %335 = xla_tuple %334
  %v336 = vmul.f32 %v331, %v333
  %337 = xla_tuple %v336
  %s338 = scalar_lea.vmem %s2, 264
  %339 = vst [vmem:[%s338] sm:$0xff] %v336
  %s340 = scalar_lea.vmem %s0, 272
  %v341 = vld [vmem:[%s340] sm:$0xff]
  %s342 = scalar_lea.vmem %s1, 272
  %v343 = vld [vmem:[%s342] sm:$0xff]
  %344 = xla_tuple %v341, %v343
  %345 = xla_tuple %344
  %v346 = vmul.f32 %v341, %v343
  %347 = xla_tuple %v346
  %s348 = scalar_lea.vmem %s2, 272
  %349 = vst [vmem:[%s348] sm:$0xff] %v346
  %s350 = scalar_lea.vmem %s0, 280
  %v351 = vld [vmem:[%s350] sm:$0xff]
  %s352 = scalar_lea.vmem %s1, 280
  %v353 = vld [vmem:[%s352] sm:$0xff]
  %354 = xla_tuple %v351, %v353
  %355 = xla_tuple %354
  %v356 = vmul.f32 %v351, %v353
  %357 = xla_tuple %v356
  %s358 = scalar_lea.vmem %s2, 280
  %359 = vst [vmem:[%s358] sm:$0xff] %v356
  %s360 = scalar_lea.vmem %s0, 288
  %v361 = vld [vmem:[%s360] sm:$0xff]
  %s362 = scalar_lea.vmem %s1, 288
  %v363 = vld [vmem:[%s362] sm:$0xff]
  %364 = xla_tuple %v361, %v363
  %365 = xla_tuple %364
  %v366 = vmul.f32 %v361, %v363
  %367 = xla_tuple %v366
  %s368 = scalar_lea.vmem %s2, 288
  %369 = vst [vmem:[%s368] sm:$0xff] %v366
  %s370 = scalar_lea.vmem %s0, 296
  %v371 = vld [vmem:[%s370] sm:$0xff]
  %s372 = scalar_lea.vmem %s1, 296
  %v373 = vld [vmem:[%s372] sm:$0xff]
  %374 = xla_tuple %v371, %v373
  %375 = xla_tuple %374
  %v376 = vmul.f32 %v371, %v373
  %377 = xla_tuple %v376
  %s378 = scalar_lea.vmem %s2, 296
  %379 = vst [vmem:[%s378] sm:$0xff] %v376
  %s380 = scalar_lea.vmem %s0, 304
  %v381 = vld [vmem:[%s380] sm:$0xff]
  %s382 = scalar_lea.vmem %s1, 304
  %v383 = vld [vmem:[%s382] sm:$0xff]
  %384 = xla_tuple %v381, %v383
  %385 = xla_tuple %384
  %v386 = vmul.f32 %v381, %v383
  %387 = xla_tuple %v386
  %s388 = scalar_lea.vmem %s2, 304
  %389 = vst [vmem:[%s388] sm:$0xff] %v386
  %s390 = scalar_lea.vmem %s0, 312
  %v391 = vld [vmem:[%s390] sm:$0xff]
  %s392 = scalar_lea.vmem %s1, 312
  %v393 = vld [vmem:[%s392] sm:$0xff]
  %394 = xla_tuple %v391, %v393
  %395 = xla_tuple %394
  %v396 = vmul.f32 %v391, %v393
  %397 = xla_tuple %v396
  %s398 = scalar_lea.vmem %s2, 312
  %399 = vst [vmem:[%s398] sm:$0xff] %v396
  %s400 = scalar_lea.vmem %s0, 320
  %v401 = vld [vmem:[%s400] sm:$0xff]
  %s402 = scalar_lea.vmem %s1, 320
  %v403 = vld [vmem:[%s402] sm:$0xff]
  %404 = xla_tuple %v401, %v403
  %405 = xla_tuple %404
  %v406 = vmul.f32 %v401, %v403
  %407 = xla_tuple %v406
  %s408 = scalar_lea.vmem %s2, 320
  %409 = vst [vmem:[%s408] sm:$0xff] %v406
  %s410 = scalar_lea.vmem %s0, 328
  %v411 = vld [vmem:[%s410] sm:$0xff]
  %s412 = scalar_lea.vmem %s1, 328
  %v413 = vld [vmem:[%s412] sm:$0xff]
  %414 = xla_tuple %v411, %v413
  %415 = xla_tuple %414
  %v416 = vmul.f32 %v411, %v413
  %417 = xla_tuple %v416
  %s418 = scalar_lea.vmem %s2, 328
  %419 = vst [vmem:[%s418] sm:$0xff] %v416
  %s420 = scalar_lea.vmem %s0, 336
  %v421 = vld [vmem:[%s420] sm:$0xff]
  %s422 = scalar_lea.vmem %s1, 336
  %v423 = vld [vmem:[%s422] sm:$0xff]
  %424 = xla_tuple %v421, %v423
  %425 = xla_tuple %424
  %v426 = vmul.f32 %v421, %v423
  %427 = xla_tuple %v426
  %s428 = scalar_lea.vmem %s2, 336
  %429 = vst [vmem:[%s428] sm:$0xff] %v426
  %s430 = scalar_lea.vmem %s0, 344
  %v431 = vld [vmem:[%s430] sm:$0xff]
  %s432 = scalar_lea.vmem %s1, 344
  %v433 = vld [vmem:[%s432] sm:$0xff]
  %434 = xla_tuple %v431, %v433
  %435 = xla_tuple %434
  %v436 = vmul.f32 %v431, %v433
  %437 = xla_tuple %v436
  %s438 = scalar_lea.vmem %s2, 344
  %439 = vst [vmem:[%s438] sm:$0xff] %v436
  %s440 = scalar_lea.vmem %s0, 352
  %v441 = vld [vmem:[%s440] sm:$0xff]
  %s442 = scalar_lea.vmem %s1, 352
  %v443 = vld [vmem:[%s442] sm:$0xff]
  %444 = xla_tuple %v441, %v443
  %445 = xla_tuple %444
  %v446 = vmul.f32 %v441, %v443
  %447 = xla_tuple %v446
  %s448 = scalar_lea.vmem %s2, 352
  %449 = vst [vmem:[%s448] sm:$0xff] %v446
  %s450 = scalar_lea.vmem %s0, 360
  %v451 = vld [vmem:[%s450] sm:$0xff]
  %s452 = scalar_lea.vmem %s1, 360
  %v453 = vld [vmem:[%s452] sm:$0xff]
  %454 = xla_tuple %v451, %v453
  %455 = xla_tuple %454
  %v456 = vmul.f32 %v451, %v453
  %457 = xla_tuple %v456
  %s458 = scalar_lea.vmem %s2, 360
  %459 = vst [vmem:[%s458] sm:$0xff] %v456
  %s460 = scalar_lea.vmem %s0, 368
  %v461 = vld [vmem:[%s460] sm:$0xff]
  %s462 = scalar_lea.vmem %s1, 368
  %v463 = vld [vmem:[%s462] sm:$0xff]
  %464 = xla_tuple %v461, %v463
  %465 = xla_tuple %464
  %v466 = vmul.f32 %v461, %v463
  %467 = xla_tuple %v466
  %s468 = scalar_lea.vmem %s2, 368
  %469 = vst [vmem:[%s468] sm:$0xff] %v466
  %s470 = scalar_lea.vmem %s0, 376
  %v471 = vld [vmem:[%s470] sm:$0xff]
  %s472 = scalar_lea.vmem %s1, 376
  %v473 = vld [vmem:[%s472] sm:$0xff]
  %474 = xla_tuple %v471, %v473
  %475 = xla_tuple %474
  %v476 = vmul.f32 %v471, %v473
  %477 = xla_tuple %v476
  %s478 = scalar_lea.vmem %s2, 376
  %479 = vst [vmem:[%s478] sm:$0xff] %v476
  %s480 = scalar_lea.vmem %s0, 384
  %v481 = vld [vmem:[%s480] sm:$0xff]
  %s482 = scalar_lea.vmem %s1, 384
  %v483 = vld [vmem:[%s482] sm:$0xff]
  %484 = xla_tuple %v481, %v483
  %485 = xla_tuple %484
  %v486 = vmul.f32 %v481, %v483
  %487 = xla_tuple %v486
  %s488 = scalar_lea.vmem %s2, 384
  %489 = vst [vmem:[%s488] sm:$0xff] %v486
  %s490 = scalar_lea.vmem %s0, 392
  %v491 = vld [vmem:[%s490] sm:$0xff]
  %s492 = scalar_lea.vmem %s1, 392
  %v493 = vld [vmem:[%s492] sm:$0xff]
  %494 = xla_tuple %v491, %v493
  %495 = xla_tuple %494
  %v496 = vmul.f32 %v491, %v493
  %497 = xla_tuple %v496
  %s498 = scalar_lea.vmem %s2, 392
  %499 = vst [vmem:[%s498] sm:$0xff] %v496
  %s500 = scalar_lea.vmem %s0, 400
  %v501 = vld [vmem:[%s500] sm:$0xff]
  %s502 = scalar_lea.vmem %s1, 400
  %v503 = vld [vmem:[%s502] sm:$0xff]
  %504 = xla_tuple %v501, %v503
  %505 = xla_tuple %504
  %v506 = vmul.f32 %v501, %v503
  %507 = xla_tuple %v506
  %s508 = scalar_lea.vmem %s2, 400
  %509 = vst [vmem:[%s508] sm:$0xff] %v506
  %s510 = scalar_lea.vmem %s0, 408
  %v511 = vld [vmem:[%s510] sm:$0xff]
  %s512 = scalar_lea.vmem %s1, 408
  %v513 = vld [vmem:[%s512] sm:$0xff]
  %514 = xla_tuple %v511, %v513
  %515 = xla_tuple %514
  %v516 = vmul.f32 %v511, %v513
  %517 = xla_tuple %v516
  %s518 = scalar_lea.vmem %s2, 408
  %519 = vst [vmem:[%s518] sm:$0xff] %v516
  %s520 = scalar_lea.vmem %s0, 416
  %v521 = vld [vmem:[%s520] sm:$0xff]
  %s522 = scalar_lea.vmem %s1, 416
  %v523 = vld [vmem:[%s522] sm:$0xff]
  %524 = xla_tuple %v521, %v523
  %525 = xla_tuple %524
  %v526 = vmul.f32 %v521, %v523
  %527 = xla_tuple %v526
  %s528 = scalar_lea.vmem %s2, 416
  %529 = vst [vmem:[%s528] sm:$0xff] %v526
  %s530 = scalar_lea.vmem %s0, 424
  %v531 = vld [vmem:[%s530] sm:$0xff]
  %s532 = scalar_lea.vmem %s1, 424
  %v533 = vld [vmem:[%s532] sm:$0xff]
  %534 = xla_tuple %v531, %v533
  %535 = xla_tuple %534
  %v536 = vmul.f32 %v531, %v533
  %537 = xla_tuple %v536
  %s538 = scalar_lea.vmem %s2, 424
  %539 = vst [vmem:[%s538] sm:$0xff] %v536
  %s540 = scalar_lea.vmem %s0, 432
  %v541 = vld [vmem:[%s540] sm:$0xff]
  %s542 = scalar_lea.vmem %s1, 432
  %v543 = vld [vmem:[%s542] sm:$0xff]
  %544 = xla_tuple %v541, %v543
  %545 = xla_tuple %544
  %v546 = vmul.f32 %v541, %v543
  %547 = xla_tuple %v546
  %s548 = scalar_lea.vmem %s2, 432
  %549 = vst [vmem:[%s548] sm:$0xff] %v546
  %s550 = scalar_lea.vmem %s0, 440
  %v551 = vld [vmem:[%s550] sm:$0xff]
  %s552 = scalar_lea.vmem %s1, 440
  %v553 = vld [vmem:[%s552] sm:$0xff]
  %554 = xla_tuple %v551, %v553
  %555 = xla_tuple %554
  %v556 = vmul.f32 %v551, %v553
  %557 = xla_tuple %v556
  %s558 = scalar_lea.vmem %s2, 440
  %559 = vst [vmem:[%s558] sm:$0xff] %v556
  %s560 = scalar_lea.vmem %s0, 448
  %v561 = vld [vmem:[%s560] sm:$0xff]
  %s562 = scalar_lea.vmem %s1, 448
  %v563 = vld [vmem:[%s562] sm:$0xff]
  %564 = xla_tuple %v561, %v563
  %565 = xla_tuple %564
  %v566 = vmul.f32 %v561, %v563
  %567 = xla_tuple %v566
  %s568 = scalar_lea.vmem %s2, 448
  %569 = vst [vmem:[%s568] sm:$0xff] %v566
  %s570 = scalar_lea.vmem %s0, 456
  %v571 = vld [vmem:[%s570] sm:$0xff]
  %s572 = scalar_lea.vmem %s1, 456
  %v573 = vld [vmem:[%s572] sm:$0xff]
  %574 = xla_tuple %v571, %v573
  %575 = xla_tuple %574
  %v576 = vmul.f32 %v571, %v573
  %577 = xla_tuple %v576
  %s578 = scalar_lea.vmem %s2, 456
  %579 = vst [vmem:[%s578] sm:$0xff] %v576
  %s580 = scalar_lea.vmem %s0, 464
  %v581 = vld [vmem:[%s580] sm:$0xff]
  %s582 = scalar_lea.vmem %s1, 464
  %v583 = vld [vmem:[%s582] sm:$0xff]
  %584 = xla_tuple %v581, %v583
  %585 = xla_tuple %584
  %v586 = vmul.f32 %v581, %v583
  %587 = xla_tuple %v586
  %s588 = scalar_lea.vmem %s2, 464
  %589 = vst [vmem:[%s588] sm:$0xff] %v586
  %s590 = scalar_lea.vmem %s0, 472
  %v591 = vld [vmem:[%s590] sm:$0xff]
  %s592 = scalar_lea.vmem %s1, 472
  %v593 = vld [vmem:[%s592] sm:$0xff]
  %594 = xla_tuple %v591, %v593
  %595 = xla_tuple %594
  %v596 = vmul.f32 %v591, %v593
  %597 = xla_tuple %v596
  %s598 = scalar_lea.vmem %s2, 472
  %599 = vst [vmem:[%s598] sm:$0xff] %v596
  %s600 = scalar_lea.vmem %s0, 480
  %v601 = vld [vmem:[%s600] sm:$0xff]
  %s602 = scalar_lea.vmem %s1, 480
  %v603 = vld [vmem:[%s602] sm:$0xff]
  %604 = xla_tuple %v601, %v603
  %605 = xla_tuple %604
  %v606 = vmul.f32 %v601, %v603
  %607 = xla_tuple %v606
  %s608 = scalar_lea.vmem %s2, 480
  %609 = vst [vmem:[%s608] sm:$0xff] %v606
  %s610 = scalar_lea.vmem %s0, 488
  %v611 = vld [vmem:[%s610] sm:$0xff]
  %s612 = scalar_lea.vmem %s1, 488
  %v613 = vld [vmem:[%s612] sm:$0xff]
  %614 = xla_tuple %v611, %v613
  %615 = xla_tuple %614
  %v616 = vmul.f32 %v611, %v613
  %617 = xla_tuple %v616
  %s618 = scalar_lea.vmem %s2, 488
  %619 = vst [vmem:[%s618] sm:$0xff] %v616
  %s620 = scalar_lea.vmem %s0, 496
  %v621 = vld [vmem:[%s620] sm:$0xff]
  %s622 = scalar_lea.vmem %s1, 496
  %v623 = vld [vmem:[%s622] sm:$0xff]
  %624 = xla_tuple %v621, %v623
  %625 = xla_tuple %624
  %v626 = vmul.f32 %v621, %v623
  %627 = xla_tuple %v626
  %s628 = scalar_lea.vmem %s2, 496
  %629 = vst [vmem:[%s628] sm:$0xff] %v626
  %s630 = scalar_lea.vmem %s0, 504
  %v631 = vld [vmem:[%s630] sm:$0xff]
  %s632 = scalar_lea.vmem %s1, 504
  %v633 = vld [vmem:[%s632] sm:$0xff]
  %634 = xla_tuple %v631, %v633
  %635 = xla_tuple %634
  %v636 = vmul.f32 %v631, %v633
  %637 = xla_tuple %v636
  %s638 = scalar_lea.vmem %s2, 504
  %639 = vst [vmem:[%s638] sm:$0xff] %v636
  %s640 = scalar_lea.vmem %s0, 512
  %v641 = vld [vmem:[%s640] sm:$0xff]
  %s642 = scalar_lea.vmem %s1, 512
  %v643 = vld [vmem:[%s642] sm:$0xff]
  %644 = xla_tuple %v641, %v643
  %645 = xla_tuple %644
  %v646 = vmul.f32 %v641, %v643
  %647 = xla_tuple %v646
  %s648 = scalar_lea.vmem %s2, 512
  %649 = vst [vmem:[%s648] sm:$0xff] %v646
  %s650 = scalar_lea.vmem %s0, 520
  %v651 = vld [vmem:[%s650] sm:$0xff]
  %s652 = scalar_lea.vmem %s1, 520
  %v653 = vld [vmem:[%s652] sm:$0xff]
  %654 = xla_tuple %v651, %v653
  %655 = xla_tuple %654
  %v656 = vmul.f32 %v651, %v653
  %657 = xla_tuple %v656
  %s658 = scalar_lea.vmem %s2, 520
  %659 = vst [vmem:[%s658] sm:$0xff] %v656
  %s660 = scalar_lea.vmem %s0, 528
  %v661 = vld [vmem:[%s660] sm:$0xff]
  %s662 = scalar_lea.vmem %s1, 528
  %v663 = vld [vmem:[%s662] sm:$0xff]
  %664 = xla_tuple %v661, %v663
  %665 = xla_tuple %664
  %v666 = vmul.f32 %v661, %v663
  %667 = xla_tuple %v666
  %s668 = scalar_lea.vmem %s2, 528
  %669 = vst [vmem:[%s668] sm:$0xff] %v666
  %s670 = scalar_lea.vmem %s0, 536
  %v671 = vld [vmem:[%s670] sm:$0xff]
  %s672 = scalar_lea.vmem %s1, 536
  %v673 = vld [vmem:[%s672] sm:$0xff]
  %674 = xla_tuple %v671, %v673
  %675 = xla_tuple %674
  %v676 = vmul.f32 %v671, %v673
  %677 = xla_tuple %v676
  %s678 = scalar_lea.vmem %s2, 536
  %679 = vst [vmem:[%s678] sm:$0xff] %v676
  %s680 = scalar_lea.vmem %s0, 544
  %v681 = vld [vmem:[%s680] sm:$0xff]
  %s682 = scalar_lea.vmem %s1, 544
  %v683 = vld [vmem:[%s682] sm:$0xff]
  %684 = xla_tuple %v681, %v683
  %685 = xla_tuple %684
  %v686 = vmul.f32 %v681, %v683
  %687 = xla_tuple %v686
  %s688 = scalar_lea.vmem %s2, 544
  %689 = vst [vmem:[%s688] sm:$0xff] %v686
  %s690 = scalar_lea.vmem %s0, 552
  %v691 = vld [vmem:[%s690] sm:$0xff]
  %s692 = scalar_lea.vmem %s1, 552
  %v693 = vld [vmem:[%s692] sm:$0xff]
  %694 = xla_tuple %v691, %v693
  %695 = xla_tuple %694
  %v696 = vmul.f32 %v691, %v693
  %697 = xla_tuple %v696
  %s698 = scalar_lea.vmem %s2, 552
  %699 = vst [vmem:[%s698] sm:$0xff] %v696
  %s700 = scalar_lea.vmem %s0, 560
  %v701 = vld [vmem:[%s700] sm:$0xff]
  %s702 = scalar_lea.vmem %s1, 560
  %v703 = vld [vmem:[%s702] sm:$0xff]
  %704 = xla_tuple %v701, %v703
  %705 = xla_tuple %704
  %v706 = vmul.f32 %v701, %v703
  %707 = xla_tuple %v706
  %s708 = scalar_lea.vmem %s2, 560
  %709 = vst [vmem:[%s708] sm:$0xff] %v706
  %s710 = scalar_lea.vmem %s0, 568
  %v711 = vld [vmem:[%s710] sm:$0xff]
  %s712 = scalar_lea.vmem %s1, 568
  %v713 = vld [vmem:[%s712] sm:$0xff]
  %714 = xla_tuple %v711, %v713
  %715 = xla_tuple %714
  %v716 = vmul.f32 %v711, %v713
  %717 = xla_tuple %v716
  %s718 = scalar_lea.vmem %s2, 568
  %719 = vst [vmem:[%s718] sm:$0xff] %v716
  %s720 = scalar_lea.vmem %s0, 576
  %v721 = vld [vmem:[%s720] sm:$0xff]
  %s722 = scalar_lea.vmem %s1, 576
  %v723 = vld [vmem:[%s722] sm:$0xff]
  %724 = xla_tuple %v721, %v723
  %725 = xla_tuple %724
  %v726 = vmul.f32 %v721, %v723
  %727 = xla_tuple %v726
  %s728 = scalar_lea.vmem %s2, 576
  %729 = vst [vmem:[%s728] sm:$0xff] %v726
  %s730 = scalar_lea.vmem %s0, 584
  %v731 = vld [vmem:[%s730] sm:$0xff]
  %s732 = scalar_lea.vmem %s1, 584
  %v733 = vld [vmem:[%s732] sm:$0xff]
  %734 = xla_tuple %v731, %v733
  %735 = xla_tuple %734
  %v736 = vmul.f32 %v731, %v733
  %737 = xla_tuple %v736
  %s738 = scalar_lea.vmem %s2, 584
  %739 = vst [vmem:[%s738] sm:$0xff] %v736
  %s740 = scalar_lea.vmem %s0, 592
  %v741 = vld [vmem:[%s740] sm:$0xff]
  %s742 = scalar_lea.vmem %s1, 592
  %v743 = vld [vmem:[%s742] sm:$0xff]
  %744 = xla_tuple %v741, %v743
  %745 = xla_tuple %744
  %v746 = vmul.f32 %v741, %v743
  %747 = xla_tuple %v746
  %s748 = scalar_lea.vmem %s2, 592
  %749 = vst [vmem:[%s748] sm:$0xff] %v746
  %s750 = scalar_lea.vmem %s0, 600
  %v751 = vld [vmem:[%s750] sm:$0xff]
  %s752 = scalar_lea.vmem %s1, 600
  %v753 = vld [vmem:[%s752] sm:$0xff]
  %754 = xla_tuple %v751, %v753
  %755 = xla_tuple %754
  %v756 = vmul.f32 %v751, %v753
  %757 = xla_tuple %v756
  %s758 = scalar_lea.vmem %s2, 600
  %759 = vst [vmem:[%s758] sm:$0xff] %v756
  %s760 = scalar_lea.vmem %s0, 608
  %v761 = vld [vmem:[%s760] sm:$0xff]
  %s762 = scalar_lea.vmem %s1, 608
  %v763 = vld [vmem:[%s762] sm:$0xff]
  %764 = xla_tuple %v761, %v763
  %765 = xla_tuple %764
  %v766 = vmul.f32 %v761, %v763
  %767 = xla_tuple %v766
  %s768 = scalar_lea.vmem %s2, 608
  %769 = vst [vmem:[%s768] sm:$0xff] %v766
  %s770 = scalar_lea.vmem %s0, 616
  %v771 = vld [vmem:[%s770] sm:$0xff]
  %s772 = scalar_lea.vmem %s1, 616
  %v773 = vld [vmem:[%s772] sm:$0xff]
  %774 = xla_tuple %v771, %v773
  %775 = xla_tuple %774
  %v776 = vmul.f32 %v771, %v773
  %777 = xla_tuple %v776
  %s778 = scalar_lea.vmem %s2, 616
  %779 = vst [vmem:[%s778] sm:$0xff] %v776
  %s780 = scalar_lea.vmem %s0, 624
  %v781 = vld [vmem:[%s780] sm:$0xff]
  %s782 = scalar_lea.vmem %s1, 624
  %v783 = vld [vmem:[%s782] sm:$0xff]
  %784 = xla_tuple %v781, %v783
  %785 = xla_tuple %784
  %v786 = vmul.f32 %v781, %v783
  %787 = xla_tuple %v786
  %s788 = scalar_lea.vmem %s2, 624
  %789 = vst [vmem:[%s788] sm:$0xff] %v786
  %s790 = scalar_lea.vmem %s0, 632
  %v791 = vld [vmem:[%s790] sm:$0xff]
  %s792 = scalar_lea.vmem %s1, 632
  %v793 = vld [vmem:[%s792] sm:$0xff]
  %794 = xla_tuple %v791, %v793
  %795 = xla_tuple %794
  %v796 = vmul.f32 %v791, %v793
  %797 = xla_tuple %v796
  %s798 = scalar_lea.vmem %s2, 632
  %799 = vst [vmem:[%s798] sm:$0xff] %v796
  %s800 = scalar_lea.vmem %s0, 640
  %v801 = vld [vmem:[%s800] sm:$0xff]
  %s802 = scalar_lea.vmem %s1, 640
  %v803 = vld [vmem:[%s802] sm:$0xff]
  %804 = xla_tuple %v801, %v803
  %805 = xla_tuple %804
  %v806 = vmul.f32 %v801, %v803
  %807 = xla_tuple %v806
  %s808 = scalar_lea.vmem %s2, 640
  %809 = vst [vmem:[%s808] sm:$0xff] %v806
  %s810 = scalar_lea.vmem %s0, 648
  %v811 = vld [vmem:[%s810] sm:$0xff]
  %s812 = scalar_lea.vmem %s1, 648
  %v813 = vld [vmem:[%s812] sm:$0xff]
  %814 = xla_tuple %v811, %v813
  %815 = xla_tuple %814
  %v816 = vmul.f32 %v811, %v813
  %817 = xla_tuple %v816
  %s818 = scalar_lea.vmem %s2, 648
  %819 = vst [vmem:[%s818] sm:$0xff] %v816
  %s820 = scalar_lea.vmem %s0, 656
  %v821 = vld [vmem:[%s820] sm:$0xff]
  %s822 = scalar_lea.vmem %s1, 656
  %v823 = vld [vmem:[%s822] sm:$0xff]
  %824 = xla_tuple %v821, %v823
  %825 = xla_tuple %824
  %v826 = vmul.f32 %v821, %v823
  %827 = xla_tuple %v826
  %s828 = scalar_lea.vmem %s2, 656
  %829 = vst [vmem:[%s828] sm:$0xff] %v826
  %s830 = scalar_lea.vmem %s0, 664
  %v831 = vld [vmem:[%s830] sm:$0xff]
  %s832 = scalar_lea.vmem %s1, 664
  %v833 = vld [vmem:[%s832] sm:$0xff]
  %834 = xla_tuple %v831, %v833
  %835 = xla_tuple %834
  %v836 = vmul.f32 %v831, %v833
  %837 = xla_tuple %v836
  %s838 = scalar_lea.vmem %s2, 664
  %839 = vst [vmem:[%s838] sm:$0xff] %v836
  %s840 = scalar_lea.vmem %s0, 672
  %v841 = vld [vmem:[%s840] sm:$0xff]
  %s842 = scalar_lea.vmem %s1, 672
  %v843 = vld [vmem:[%s842] sm:$0xff]
  %844 = xla_tuple %v841, %v843
  %845 = xla_tuple %844
  %v846 = vmul.f32 %v841, %v843
  %847 = xla_tuple %v846
  %s848 = scalar_lea.vmem %s2, 672
  %849 = vst [vmem:[%s848] sm:$0xff] %v846
  %s850 = scalar_lea.vmem %s0, 680
  %v851 = vld [vmem:[%s850] sm:$0xff]
  %s852 = scalar_lea.vmem %s1, 680
  %v853 = vld [vmem:[%s852] sm:$0xff]
  %854 = xla_tuple %v851, %v853
  %855 = xla_tuple %854
  %v856 = vmul.f32 %v851, %v853
  %857 = xla_tuple %v856
  %s858 = scalar_lea.vmem %s2, 680
  %859 = vst [vmem:[%s858] sm:$0xff] %v856
  %s860 = scalar_lea.vmem %s0, 688
  %v861 = vld [vmem:[%s860] sm:$0xff]
  %s862 = scalar_lea.vmem %s1, 688
  %v863 = vld [vmem:[%s862] sm:$0xff]
  %864 = xla_tuple %v861, %v863
  %865 = xla_tuple %864
  %v866 = vmul.f32 %v861, %v863
  %867 = xla_tuple %v866
  %s868 = scalar_lea.vmem %s2, 688
  %869 = vst [vmem:[%s868] sm:$0xff] %v866
  %s870 = scalar_lea.vmem %s0, 696
  %v871 = vld [vmem:[%s870] sm:$0xff]
  %s872 = scalar_lea.vmem %s1, 696
  %v873 = vld [vmem:[%s872] sm:$0xff]
  %874 = xla_tuple %v871, %v873
  %875 = xla_tuple %874
  %v876 = vmul.f32 %v871, %v873
  %877 = xla_tuple %v876
  %s878 = scalar_lea.vmem %s2, 696
  %879 = vst [vmem:[%s878] sm:$0xff] %v876
  %s880 = scalar_lea.vmem %s0, 704
  %v881 = vld [vmem:[%s880] sm:$0xff]
  %s882 = scalar_lea.vmem %s1, 704
  %v883 = vld [vmem:[%s882] sm:$0xff]
  %884 = xla_tuple %v881, %v883
  %885 = xla_tuple %884
  %v886 = vmul.f32 %v881, %v883
  %887 = xla_tuple %v886
  %s888 = scalar_lea.vmem %s2, 704
  %889 = vst [vmem:[%s888] sm:$0xff] %v886
  %s890 = scalar_lea.vmem %s0, 712
  %v891 = vld [vmem:[%s890] sm:$0xff]
  %s892 = scalar_lea.vmem %s1, 712
  %v893 = vld [vmem:[%s892] sm:$0xff]
  %894 = xla_tuple %v891, %v893
  %895 = xla_tuple %894
  %v896 = vmul.f32 %v891, %v893
  %897 = xla_tuple %v896
  %s898 = scalar_lea.vmem %s2, 712
  %899 = vst [vmem:[%s898] sm:$0xff] %v896
  %s900 = scalar_lea.vmem %s0, 720
  %v901 = vld [vmem:[%s900] sm:$0xff]
  %s902 = scalar_lea.vmem %s1, 720
  %v903 = vld [vmem:[%s902] sm:$0xff]
  %904 = xla_tuple %v901, %v903
  %905 = xla_tuple %904
  %v906 = vmul.f32 %v901, %v903
  %907 = xla_tuple %v906
  %s908 = scalar_lea.vmem %s2, 720
  %909 = vst [vmem:[%s908] sm:$0xff] %v906
  %s910 = scalar_lea.vmem %s0, 728
  %v911 = vld [vmem:[%s910] sm:$0xff]
  %s912 = scalar_lea.vmem %s1, 728
  %v913 = vld [vmem:[%s912] sm:$0xff]
  %914 = xla_tuple %v911, %v913
  %915 = xla_tuple %914
  %v916 = vmul.f32 %v911, %v913
  %917 = xla_tuple %v916
  %s918 = scalar_lea.vmem %s2, 728
  %919 = vst [vmem:[%s918] sm:$0xff] %v916
  %s920 = scalar_lea.vmem %s0, 736
  %v921 = vld [vmem:[%s920] sm:$0xff]
  %s922 = scalar_lea.vmem %s1, 736
  %v923 = vld [vmem:[%s922] sm:$0xff]
  %924 = xla_tuple %v921, %v923
  %925 = xla_tuple %924
  %v926 = vmul.f32 %v921, %v923
  %927 = xla_tuple %v926
  %s928 = scalar_lea.vmem %s2, 736
  %929 = vst [vmem:[%s928] sm:$0xff] %v926
  %s930 = scalar_lea.vmem %s0, 744
  %v931 = vld [vmem:[%s930] sm:$0xff]
  %s932 = scalar_lea.vmem %s1, 744
  %v933 = vld [vmem:[%s932] sm:$0xff]
  %934 = xla_tuple %v931, %v933
  %935 = xla_tuple %934
  %v936 = vmul.f32 %v931, %v933
  %937 = xla_tuple %v936
  %s938 = scalar_lea.vmem %s2, 744
  %939 = vst [vmem:[%s938] sm:$0xff] %v936
  %s940 = scalar_lea.vmem %s0, 752
  %v941 = vld [vmem:[%s940] sm:$0xff]
  %s942 = scalar_lea.vmem %s1, 752
  %v943 = vld [vmem:[%s942] sm:$0xff]
  %944 = xla_tuple %v941, %v943
  %945 = xla_tuple %944
  %v946 = vmul.f32 %v941, %v943
  %947 = xla_tuple %v946
  %s948 = scalar_lea.vmem %s2, 752
  %949 = vst [vmem:[%s948] sm:$0xff] %v946
  %s950 = scalar_lea.vmem %s0, 760
  %v951 = vld [vmem:[%s950] sm:$0xff]
  %s952 = scalar_lea.vmem %s1, 760
  %v953 = vld [vmem:[%s952] sm:$0xff]
  %954 = xla_tuple %v951, %v953
  %955 = xla_tuple %954
  %v956 = vmul.f32 %v951, %v953
  %957 = xla_tuple %v956
  %s958 = scalar_lea.vmem %s2, 760
  %959 = vst [vmem:[%s958] sm:$0xff] %v956
  %s960 = scalar_lea.vmem %s0, 768
  %v961 = vld [vmem:[%s960] sm:$0xff]
  %s962 = scalar_lea.vmem %s1, 768
  %v963 = vld [vmem:[%s962] sm:$0xff]
  %964 = xla_tuple %v961, %v963
  %965 = xla_tuple %964
  %v966 = vmul.f32 %v961, %v963
  %967 = xla_tuple %v966
  %s968 = scalar_lea.vmem %s2, 768
  %969 = vst [vmem:[%s968] sm:$0xff] %v966
  %s970 = scalar_lea.vmem %s0, 776
  %v971 = vld [vmem:[%s970] sm:$0xff]
  %s972 = scalar_lea.vmem %s1, 776
  %v973 = vld [vmem:[%s972] sm:$0xff]
  %974 = xla_tuple %v971, %v973
  %975 = xla_tuple %974
  %v976 = vmul.f32 %v971, %v973
  %977 = xla_tuple %v976
  %s978 = scalar_lea.vmem %s2, 776
  %979 = vst [vmem:[%s978] sm:$0xff] %v976
  %s980 = scalar_lea.vmem %s0, 784
  %v981 = vld [vmem:[%s980] sm:$0xff]
  %s982 = scalar_lea.vmem %s1, 784
  %v983 = vld [vmem:[%s982] sm:$0xff]
  %984 = xla_tuple %v981, %v983
  %985 = xla_tuple %984
  %v986 = vmul.f32 %v981, %v983
  %987 = xla_tuple %v986
  %s988 = scalar_lea.vmem %s2, 784
  %989 = vst [vmem:[%s988] sm:$0xff] %v986
  %s990 = scalar_lea.vmem %s0, 792
  %v991 = vld [vmem:[%s990] sm:$0xff]
  %s992 = scalar_lea.vmem %s1, 792
  %v993 = vld [vmem:[%s992] sm:$0xff]
  %994 = xla_tuple %v991, %v993
  %995 = xla_tuple %994
  %v996 = vmul.f32 %v991, %v993
  %997 = xla_tuple %v996
  %s998 = scalar_lea.vmem %s2, 792
  %999 = vst [vmem:[%s998] sm:$0xff] %v996
  %s1000 = scalar_lea.vmem %s0, 800
  %v1001 = vld [vmem:[%s1000] sm:$0xff]
  %s1002 = scalar_lea.vmem %s1, 800
  %v1003 = vld [vmem:[%s1002] sm:$0xff]
  %1004 = xla_tuple %v1001, %v1003
  %1005 = xla_tuple %1004
  %v1006 = vmul.f32 %v1001, %v1003
  %1007 = xla_tuple %v1006
  %s1008 = scalar_lea.vmem %s2, 800
  %1009 = vst [vmem:[%s1008] sm:$0xff] %v1006
  %s1010 = scalar_lea.vmem %s0, 808
  %v1011 = vld [vmem:[%s1010] sm:$0xff]
  %s1012 = scalar_lea.vmem %s1, 808
  %v1013 = vld [vmem:[%s1012] sm:$0xff]
  %1014 = xla_tuple %v1011, %v1013
  %1015 = xla_tuple %1014
  %v1016 = vmul.f32 %v1011, %v1013
  %1017 = xla_tuple %v1016
  %s1018 = scalar_lea.vmem %s2, 808
  %1019 = vst [vmem:[%s1018] sm:$0xff] %v1016
  %s1020 = scalar_lea.vmem %s0, 816
  %v1021 = vld [vmem:[%s1020] sm:$0xff]
  %s1022 = scalar_lea.vmem %s1, 816
  %v1023 = vld [vmem:[%s1022] sm:$0xff]
  %1024 = xla_tuple %v1021, %v1023
  %1025 = xla_tuple %1024
  %v1026 = vmul.f32 %v1021, %v1023
  %1027 = xla_tuple %v1026
  %s1028 = scalar_lea.vmem %s2, 816
  %1029 = vst [vmem:[%s1028] sm:$0xff] %v1026
  %s1030 = scalar_lea.vmem %s0, 824
  %v1031 = vld [vmem:[%s1030] sm:$0xff]
  %s1032 = scalar_lea.vmem %s1, 824
  %v1033 = vld [vmem:[%s1032] sm:$0xff]
  %1034 = xla_tuple %v1031, %v1033
  %1035 = xla_tuple %1034
  %v1036 = vmul.f32 %v1031, %v1033
  %1037 = xla_tuple %v1036
  %s1038 = scalar_lea.vmem %s2, 824
  %1039 = vst [vmem:[%s1038] sm:$0xff] %v1036
  %s1040 = scalar_lea.vmem %s0, 832
  %v1041 = vld [vmem:[%s1040] sm:$0xff]
  %s1042 = scalar_lea.vmem %s1, 832
  %v1043 = vld [vmem:[%s1042] sm:$0xff]
  %1044 = xla_tuple %v1041, %v1043
  %1045 = xla_tuple %1044
  %v1046 = vmul.f32 %v1041, %v1043
  %1047 = xla_tuple %v1046
  %s1048 = scalar_lea.vmem %s2, 832
  %1049 = vst [vmem:[%s1048] sm:$0xff] %v1046
  %s1050 = scalar_lea.vmem %s0, 840
  %v1051 = vld [vmem:[%s1050] sm:$0xff]
  %s1052 = scalar_lea.vmem %s1, 840
  %v1053 = vld [vmem:[%s1052] sm:$0xff]
  %1054 = xla_tuple %v1051, %v1053
  %1055 = xla_tuple %1054
  %v1056 = vmul.f32 %v1051, %v1053
  %1057 = xla_tuple %v1056
  %s1058 = scalar_lea.vmem %s2, 840
  %1059 = vst [vmem:[%s1058] sm:$0xff] %v1056
  %s1060 = scalar_lea.vmem %s0, 848
  %v1061 = vld [vmem:[%s1060] sm:$0xff]
  %s1062 = scalar_lea.vmem %s1, 848
  %v1063 = vld [vmem:[%s1062] sm:$0xff]
  %1064 = xla_tuple %v1061, %v1063
  %1065 = xla_tuple %1064
  %v1066 = vmul.f32 %v1061, %v1063
  %1067 = xla_tuple %v1066
  %s1068 = scalar_lea.vmem %s2, 848
  %1069 = vst [vmem:[%s1068] sm:$0xff] %v1066
  %s1070 = scalar_lea.vmem %s0, 856
  %v1071 = vld [vmem:[%s1070] sm:$0xff]
  %s1072 = scalar_lea.vmem %s1, 856
  %v1073 = vld [vmem:[%s1072] sm:$0xff]
  %1074 = xla_tuple %v1071, %v1073
  %1075 = xla_tuple %1074
  %v1076 = vmul.f32 %v1071, %v1073
  %1077 = xla_tuple %v1076
  %s1078 = scalar_lea.vmem %s2, 856
  %1079 = vst [vmem:[%s1078] sm:$0xff] %v1076
  %s1080 = scalar_lea.vmem %s0, 864
  %v1081 = vld [vmem:[%s1080] sm:$0xff]
  %s1082 = scalar_lea.vmem %s1, 864
  %v1083 = vld [vmem:[%s1082] sm:$0xff]
  %1084 = xla_tuple %v1081, %v1083
  %1085 = xla_tuple %1084
  %v1086 = vmul.f32 %v1081, %v1083
  %1087 = xla_tuple %v1086
  %s1088 = scalar_lea.vmem %s2, 864
  %1089 = vst [vmem:[%s1088] sm:$0xff] %v1086
  %s1090 = scalar_lea.vmem %s0, 872
  %v1091 = vld [vmem:[%s1090] sm:$0xff]
  %s1092 = scalar_lea.vmem %s1, 872
  %v1093 = vld [vmem:[%s1092] sm:$0xff]
  %1094 = xla_tuple %v1091, %v1093
  %1095 = xla_tuple %1094
  %v1096 = vmul.f32 %v1091, %v1093
  %1097 = xla_tuple %v1096
  %s1098 = scalar_lea.vmem %s2, 872
  %1099 = vst [vmem:[%s1098] sm:$0xff] %v1096
  %s1100 = scalar_lea.vmem %s0, 880
  %v1101 = vld [vmem:[%s1100] sm:$0xff]
  %s1102 = scalar_lea.vmem %s1, 880
  %v1103 = vld [vmem:[%s1102] sm:$0xff]
  %1104 = xla_tuple %v1101, %v1103
  %1105 = xla_tuple %1104
  %v1106 = vmul.f32 %v1101, %v1103
  %1107 = xla_tuple %v1106
  %s1108 = scalar_lea.vmem %s2, 880
  %1109 = vst [vmem:[%s1108] sm:$0xff] %v1106
  %s1110 = scalar_lea.vmem %s0, 888
  %v1111 = vld [vmem:[%s1110] sm:$0xff]
  %s1112 = scalar_lea.vmem %s1, 888
  %v1113 = vld [vmem:[%s1112] sm:$0xff]
  %1114 = xla_tuple %v1111, %v1113
  %1115 = xla_tuple %1114
  %v1116 = vmul.f32 %v1111, %v1113
  %1117 = xla_tuple %v1116
  %s1118 = scalar_lea.vmem %s2, 888
  %1119 = vst [vmem:[%s1118] sm:$0xff] %v1116
  %s1120 = scalar_lea.vmem %s0, 896
  %v1121 = vld [vmem:[%s1120] sm:$0xff]
  %s1122 = scalar_lea.vmem %s1, 896
  %v1123 = vld [vmem:[%s1122] sm:$0xff]
  %1124 = xla_tuple %v1121, %v1123
  %1125 = xla_tuple %1124
  %v1126 = vmul.f32 %v1121, %v1123
  %1127 = xla_tuple %v1126
  %s1128 = scalar_lea.vmem %s2, 896
  %1129 = vst [vmem:[%s1128] sm:$0xff] %v1126
  %s1130 = scalar_lea.vmem %s0, 904
  %v1131 = vld [vmem:[%s1130] sm:$0xff]
  %s1132 = scalar_lea.vmem %s1, 904
  %v1133 = vld [vmem:[%s1132] sm:$0xff]
  %1134 = xla_tuple %v1131, %v1133
  %1135 = xla_tuple %1134
  %v1136 = vmul.f32 %v1131, %v1133
  %1137 = xla_tuple %v1136
  %s1138 = scalar_lea.vmem %s2, 904
  %1139 = vst [vmem:[%s1138] sm:$0xff] %v1136
  %s1140 = scalar_lea.vmem %s0, 912
  %v1141 = vld [vmem:[%s1140] sm:$0xff]
  %s1142 = scalar_lea.vmem %s1, 912
  %v1143 = vld [vmem:[%s1142] sm:$0xff]
  %1144 = xla_tuple %v1141, %v1143
  %1145 = xla_tuple %1144
  %v1146 = vmul.f32 %v1141, %v1143
  %1147 = xla_tuple %v1146
  %s1148 = scalar_lea.vmem %s2, 912
  %1149 = vst [vmem:[%s1148] sm:$0xff] %v1146
  %s1150 = scalar_lea.vmem %s0, 920
  %v1151 = vld [vmem:[%s1150] sm:$0xff]
  %s1152 = scalar_lea.vmem %s1, 920
  %v1153 = vld [vmem:[%s1152] sm:$0xff]
  %1154 = xla_tuple %v1151, %v1153
  %1155 = xla_tuple %1154
  %v1156 = vmul.f32 %v1151, %v1153
  %1157 = xla_tuple %v1156
  %s1158 = scalar_lea.vmem %s2, 920
  %1159 = vst [vmem:[%s1158] sm:$0xff] %v1156
  %s1160 = scalar_lea.vmem %s0, 928
  %v1161 = vld [vmem:[%s1160] sm:$0xff]
  %s1162 = scalar_lea.vmem %s1, 928
  %v1163 = vld [vmem:[%s1162] sm:$0xff]
  %1164 = xla_tuple %v1161, %v1163
  %1165 = xla_tuple %1164
  %v1166 = vmul.f32 %v1161, %v1163
  %1167 = xla_tuple %v1166
  %s1168 = scalar_lea.vmem %s2, 928
  %1169 = vst [vmem:[%s1168] sm:$0xff] %v1166
  %s1170 = scalar_lea.vmem %s0, 936
  %v1171 = vld [vmem:[%s1170] sm:$0xff]
  %s1172 = scalar_lea.vmem %s1, 936
  %v1173 = vld [vmem:[%s1172] sm:$0xff]
  %1174 = xla_tuple %v1171, %v1173
  %1175 = xla_tuple %1174
  %v1176 = vmul.f32 %v1171, %v1173
  %1177 = xla_tuple %v1176
  %s1178 = scalar_lea.vmem %s2, 936
  %1179 = vst [vmem:[%s1178] sm:$0xff] %v1176
  %s1180 = scalar_lea.vmem %s0, 944
  %v1181 = vld [vmem:[%s1180] sm:$0xff]
  %s1182 = scalar_lea.vmem %s1, 944
  %v1183 = vld [vmem:[%s1182] sm:$0xff]
  %1184 = xla_tuple %v1181, %v1183
  %1185 = xla_tuple %1184
  %v1186 = vmul.f32 %v1181, %v1183
  %1187 = xla_tuple %v1186
  %s1188 = scalar_lea.vmem %s2, 944
  %1189 = vst [vmem:[%s1188] sm:$0xff] %v1186
  %s1190 = scalar_lea.vmem %s0, 952
  %v1191 = vld [vmem:[%s1190] sm:$0xff]
  %s1192 = scalar_lea.vmem %s1, 952
  %v1193 = vld [vmem:[%s1192] sm:$0xff]
  %1194 = xla_tuple %v1191, %v1193
  %1195 = xla_tuple %1194
  %v1196 = vmul.f32 %v1191, %v1193
  %1197 = xla_tuple %v1196
  %s1198 = scalar_lea.vmem %s2, 952
  %1199 = vst [vmem:[%s1198] sm:$0xff] %v1196
  %s1200 = scalar_lea.vmem %s0, 960
  %v1201 = vld [vmem:[%s1200] sm:$0xff]
  %s1202 = scalar_lea.vmem %s1, 960
  %v1203 = vld [vmem:[%s1202] sm:$0xff]
  %1204 = xla_tuple %v1201, %v1203
  %1205 = xla_tuple %1204
  %v1206 = vmul.f32 %v1201, %v1203
  %1207 = xla_tuple %v1206
  %s1208 = scalar_lea.vmem %s2, 960
  %1209 = vst [vmem:[%s1208] sm:$0xff] %v1206
  %s1210 = scalar_lea.vmem %s0, 968
  %v1211 = vld [vmem:[%s1210] sm:$0xff]
  %s1212 = scalar_lea.vmem %s1, 968
  %v1213 = vld [vmem:[%s1212] sm:$0xff]
  %1214 = xla_tuple %v1211, %v1213
  %1215 = xla_tuple %1214
  %v1216 = vmul.f32 %v1211, %v1213
  %1217 = xla_tuple %v1216
  %s1218 = scalar_lea.vmem %s2, 968
  %1219 = vst [vmem:[%s1218] sm:$0xff] %v1216
  %s1220 = scalar_lea.vmem %s0, 976
  %v1221 = vld [vmem:[%s1220] sm:$0xff]
  %s1222 = scalar_lea.vmem %s1, 976
  %v1223 = vld [vmem:[%s1222] sm:$0xff]
  %1224 = xla_tuple %v1221, %v1223
  %1225 = xla_tuple %1224
  %v1226 = vmul.f32 %v1221, %v1223
  %1227 = xla_tuple %v1226
  %s1228 = scalar_lea.vmem %s2, 976
  %1229 = vst [vmem:[%s1228] sm:$0xff] %v1226
  %s1230 = scalar_lea.vmem %s0, 984
  %v1231 = vld [vmem:[%s1230] sm:$0xff]
  %s1232 = scalar_lea.vmem %s1, 984
  %v1233 = vld [vmem:[%s1232] sm:$0xff]
  %1234 = xla_tuple %v1231, %v1233
  %1235 = xla_tuple %1234
  %v1236 = vmul.f32 %v1231, %v1233
  %1237 = xla_tuple %v1236
  %s1238 = scalar_lea.vmem %s2, 984
  %1239 = vst [vmem:[%s1238] sm:$0xff] %v1236
  %s1240 = scalar_lea.vmem %s0, 992
  %v1241 = vld [vmem:[%s1240] sm:$0xff]
  %s1242 = scalar_lea.vmem %s1, 992
  %v1243 = vld [vmem:[%s1242] sm:$0xff]
  %1244 = xla_tuple %v1241, %v1243
  %1245 = xla_tuple %1244
  %v1246 = vmul.f32 %v1241, %v1243
  %1247 = xla_tuple %v1246
  %s1248 = scalar_lea.vmem %s2, 992
  %1249 = vst [vmem:[%s1248] sm:$0xff] %v1246
  %s1250 = scalar_lea.vmem %s0, 1000
  %v1251 = vld [vmem:[%s1250] sm:$0xff]
  %s1252 = scalar_lea.vmem %s1, 1000
  %v1253 = vld [vmem:[%s1252] sm:$0xff]
  %1254 = xla_tuple %v1251, %v1253
  %1255 = xla_tuple %1254
  %v1256 = vmul.f32 %v1251, %v1253
  %1257 = xla_tuple %v1256
  %s1258 = scalar_lea.vmem %s2, 1000
  %1259 = vst [vmem:[%s1258] sm:$0xff] %v1256
  %s1260 = scalar_lea.vmem %s0, 1008
  %v1261 = vld [vmem:[%s1260] sm:$0xff]
  %s1262 = scalar_lea.vmem %s1, 1008
  %v1263 = vld [vmem:[%s1262] sm:$0xff]
  %1264 = xla_tuple %v1261, %v1263
  %1265 = xla_tuple %1264
  %v1266 = vmul.f32 %v1261, %v1263
  %1267 = xla_tuple %v1266
  %s1268 = scalar_lea.vmem %s2, 1008
  %1269 = vst [vmem:[%s1268] sm:$0xff] %v1266
  %s1270 = scalar_lea.vmem %s0, 1016
  %v1271 = vld [vmem:[%s1270] sm:$0xff]
  %s1272 = scalar_lea.vmem %s1, 1016
  %v1273 = vld [vmem:[%s1272] sm:$0xff]
  %1274 = xla_tuple %v1271, %v1273
  %1275 = xla_tuple %1274
  %v1276 = vmul.f32 %v1271, %v1273
  %1277 = xla_tuple %v1276
  %s1278 = scalar_lea.vmem %s2, 1016
  %1279 = vst [vmem:[%s1278] sm:$0xff] %v1276

// kernel: lca11_forward.1
$region0: #{lca11_forward.1}
  #allocation0 [shape = 'u32[]', space=smem, size = 0x4, offset = 0x4, fixed_abs, tag = 'smem constant byte address 0x4 - core index']
  #allocation1 [shape = 'u32[144,128]{1,0:T(1,128)}', space=vmem, size = 0x12000, scoped, tag = 'internal scratch']
  #allocation2 [shape = 'f32[1]{0:T(128)S(6)}', space=smem, size = 0x200, scoped, tag = 'scoped memory for lca11_forward.1']
  %s0 = inlined_call_operand.vmem [shape: f32[2,2,32,256], index: 0, kind: input, shape index: {}]
  %s1 = inlined_call_operand.vmem [shape: f32[2,2,256], index: 1, kind: input, shape index: {}]
  %s2 = inlined_call_operand.vmem [shape: f32[2,64,64], index: 2, kind: input, shape index: {}]
  %s3 = inlined_call_operand.vmem [shape: f32[32,2], index: 3, kind: input, shape index: {}]
  %s4 = inlined_call_operand.vmem [shape: f32[2,32], index: 4, kind: input, shape index: {}]
  %s5 = inlined_call_operand.vmem [shape: bf16[64,256], index: 5, kind: input, shape index: {}]
  %s6 = inlined_call_operand.vmem [shape: f32[512,256], index: 6, kind: input, shape index: {}]
  %s7 = inlined_call_operand.<no memory space> [shape: f32[1], index: 7, kind: input, shape index: {}]
  %s8 = inlined_call_operand.vmem [shape: f32[2,2,32,256], index: 8, kind: output, shape index: {}]
  %s9 = sld [smem:[#allocation0]]
  $region65: #{lca11_forward.1} parent=0
    _
  %s11 = ssub.s32 1, %s9
  %s12 = scalar_select 0, %s11, %s9
  %13 = sst [smem:[#allocation2]] %s7
  loop: start=0, step=1, limit=4
  $region2: #{lca11_forward.1} parent=0 // loop_pre_header
    _
  $region3: #{lca11_forward.1} parent=0 // loop_header
    %s15 = sphi 0, %s19
    %p16 = scmp.ge.s32.totalorder %s15, 4
    %s25 = sphi 0, %s27
    %s28 = sphi 0, %s25
    %s29 = sphi 0, %s28
    %s45 = sphi 0, %s29
    %s51 = sphi 0, %s53
    %s54 = sphi 0, %s51
    %s55 = sphi 0, %s54
    %s71 = sphi 0, %s55
    %s77 = sphi 0, %s79
    %s80 = sphi 0, %s77
    %s81 = sphi 0, %s80
    %s97 = sphi 0, %s81
    %s101 = sphi 0, %s101
    %s103 = sphi 0, %s101
    %s104 = sphi 0, %s103
    %s118 = sphi 0, %s104
    %s122 = sphi 0, %s122
    %s124 = sphi 0, %s122
    %s125 = sphi 0, %s124
    %s139 = sphi 0, %s125
    %s143 = sphi 0, %s143
    %s145 = sphi 0, %s143
    %s146 = sphi 0, %s145
    %s160 = sphi 0, %s146
    %s164 = sphi 0, %s164
    %s166 = sphi 0, %s164
    %s167 = sphi 0, %s166
    %s181 = sphi 0, %s167
    %s185 = sphi 0, %s185
    %s187 = sphi 0, %s185
    %s188 = sphi 0, %s187
    %s202 = sphi 0, %s188
    %s208 = sphi 0, %s210
    %s211 = sphi 0, %s208
    %s212 = sphi 0, %s211
    %s228 = sphi 0, %s212
  $region4: #{lca11_forward.1} parent=0 // loop_header_branch
    %18 = sbr.rel (%p16) target = $region8
  $region5: #{lca11_forward.1} parent=0 // loop_body
    %s20 = ssub.s32 %s15, 1
    %s21 = ssub.s32 %s15, 2
    %s22 = sadd.s32 %s15, 1
    %s23 = ssub.s32 %s15, %s22
    %p24 = scmp.eq.s32.totalorder %s23, 0
    %s26 = sadd.s32 %s25, 1
    %s27 = scalar_select %p24, %s25, %s26
    %p30 = pneg %p24
    %p31 = scmp.eq.s32.totalorder %s15, 1
    %p32 = por %p30, %p31
    %p33 = scmp.ne.s32.totalorder %s25, %s28
    %p34 = scmp.eq.s32.totalorder %s15, 0
    %p35 = por %p33, %p34
    %p36 = scmp.ne.s32.totalorder %s25, %s28
    %p37 = scmp.eq.s32.totalorder %s20, 1
    %p38 = por %p36, %p37
    %p39 = scmp.ne.s32.totalorder %s28, %s29
    %p40 = scmp.eq.s32.totalorder %s20, 0
    %p41 = por %p39, %p40
    %p42 = scmp.ne.s32.totalorder %s28, %s29
    %p43 = scmp.eq.s32.totalorder %s21, 1
    %p44 = por %p42, %p43
    %p46 = scmp.ne.s32.totalorder %s29, %s45
    %p47 = scmp.eq.s32.totalorder %s21, 0
    %p48 = por %p46, %p47
    %s49 = ssub.s32 %s15, %s22
    %p50 = scmp.eq.s32.totalorder %s49, 0
    %s52 = sadd.s32 %s51, 1
    %s53 = scalar_select %p50, %s51, %s52
    %p56 = pneg %p50
    %p57 = scmp.eq.s32.totalorder %s15, 1
    %p58 = por %p56, %p57
    %p59 = scmp.ne.s32.totalorder %s51, %s54
    %p60 = scmp.eq.s32.totalorder %s15, 0
    %p61 = por %p59, %p60
    %p62 = scmp.ne.s32.totalorder %s51, %s54
    %p63 = scmp.eq.s32.totalorder %s20, 1
    %p64 = por %p62, %p63
    %p65 = scmp.ne.s32.totalorder %s54, %s55
    %p66 = scmp.eq.s32.totalorder %s20, 0
    %p67 = por %p65, %p66
    %p68 = scmp.ne.s32.totalorder %s54, %s55
    %p69 = scmp.eq.s32.totalorder %s21, 1
    %p70 = por %p68, %p69
    %p72 = scmp.ne.s32.totalorder %s55, %s71
    %p73 = scmp.eq.s32.totalorder %s21, 0
    %p74 = por %p72, %p73
    %s75 = ssub.s32 %s15, %s22
    %p76 = scmp.eq.s32.totalorder %s75, 0
    %s78 = sadd.s32 %s77, 1
    %s79 = scalar_select %p76, %s77, %s78
    %p82 = pneg %p76
    %p83 = scmp.eq.s32.totalorder %s15, 1
    %p84 = por %p82, %p83
    %p85 = scmp.ne.s32.totalorder %s77, %s80
    %p86 = scmp.eq.s32.totalorder %s15, 0
    %p87 = por %p85, %p86
    %p88 = scmp.ne.s32.totalorder %s77, %s80
    %p89 = scmp.eq.s32.totalorder %s20, 1
    %p90 = por %p88, %p89
    %p91 = scmp.ne.s32.totalorder %s80, %s81
    %p92 = scmp.eq.s32.totalorder %s20, 0
    %p93 = por %p91, %p92
    %p94 = scmp.ne.s32.totalorder %s80, %s81
    %p95 = scmp.eq.s32.totalorder %s21, 1
    %p96 = por %p94, %p95
    %p98 = scmp.ne.s32.totalorder %s81, %s97
    %p99 = scmp.eq.s32.totalorder %s21, 0
    %p100 = por %p98, %p99
    %s102 = sadd.s32 %s101, 1
    %p105 = scmp.eq.s32.totalorder %s15, 1
    %p106 = scmp.ne.s32.totalorder %s101, %s103
    %p107 = scmp.eq.s32.totalorder %s15, 0
    %p108 = por %p106, %p107
    %p109 = scmp.ne.s32.totalorder %s101, %s103
    %p110 = scmp.eq.s32.totalorder %s20, 1
    %p111 = por %p109, %p110
    %p112 = scmp.ne.s32.totalorder %s103, %s104
    %p113 = scmp.eq.s32.totalorder %s20, 0
    %p114 = por %p112, %p113
    %p115 = scmp.ne.s32.totalorder %s103, %s104
    %p116 = scmp.eq.s32.totalorder %s21, 1
    %p117 = por %p115, %p116
    %p119 = scmp.ne.s32.totalorder %s104, %s118
    %p120 = scmp.eq.s32.totalorder %s21, 0
    %p121 = por %p119, %p120
    %s123 = sadd.s32 %s122, 1
    %p126 = scmp.eq.s32.totalorder %s15, 1
    %p127 = scmp.ne.s32.totalorder %s122, %s124
    %p128 = scmp.eq.s32.totalorder %s15, 0
    %p129 = por %p127, %p128
    %p130 = scmp.ne.s32.totalorder %s122, %s124
    %p131 = scmp.eq.s32.totalorder %s20, 1
    %p132 = por %p130, %p131
    %p133 = scmp.ne.s32.totalorder %s124, %s125
    %p134 = scmp.eq.s32.totalorder %s20, 0
    %p135 = por %p133, %p134
    %p136 = scmp.ne.s32.totalorder %s124, %s125
    %p137 = scmp.eq.s32.totalorder %s21, 1
    %p138 = por %p136, %p137
    %p140 = scmp.ne.s32.totalorder %s125, %s139
    %p141 = scmp.eq.s32.totalorder %s21, 0
    %p142 = por %p140, %p141
    %s144 = sadd.s32 %s143, 1
    %p147 = scmp.eq.s32.totalorder %s15, 1
    %p148 = scmp.ne.s32.totalorder %s143, %s145
    %p149 = scmp.eq.s32.totalorder %s15, 0
    %p150 = por %p148, %p149
    %p151 = scmp.ne.s32.totalorder %s143, %s145
    %p152 = scmp.eq.s32.totalorder %s20, 1
    %p153 = por %p151, %p152
    %p154 = scmp.ne.s32.totalorder %s145, %s146
    %p155 = scmp.eq.s32.totalorder %s20, 0
    %p156 = por %p154, %p155
    %p157 = scmp.ne.s32.totalorder %s145, %s146
    %p158 = scmp.eq.s32.totalorder %s21, 1
    %p159 = por %p157, %p158
    %p161 = scmp.ne.s32.totalorder %s146, %s160
    %p162 = scmp.eq.s32.totalorder %s21, 0
    %p163 = por %p161, %p162
    %s165 = sadd.s32 %s164, 1
    %p168 = scmp.eq.s32.totalorder %s15, 1
    %p169 = scmp.ne.s32.totalorder %s164, %s166
    %p170 = scmp.eq.s32.totalorder %s15, 0
    %p171 = por %p169, %p170
    %p172 = scmp.ne.s32.totalorder %s164, %s166
    %p173 = scmp.eq.s32.totalorder %s20, 1
    %p174 = por %p172, %p173
    %p175 = scmp.ne.s32.totalorder %s166, %s167
    %p176 = scmp.eq.s32.totalorder %s20, 0
    %p177 = por %p175, %p176
    %p178 = scmp.ne.s32.totalorder %s166, %s167
    %p179 = scmp.eq.s32.totalorder %s21, 1
    %p180 = por %p178, %p179
    %p182 = scmp.ne.s32.totalorder %s167, %s181
    %p183 = scmp.eq.s32.totalorder %s21, 0
    %p184 = por %p182, %p183
    %s186 = sadd.s32 %s185, 1
    %p189 = scmp.eq.s32.totalorder %s15, 1
    %p190 = scmp.ne.s32.totalorder %s185, %s187
    %p191 = scmp.eq.s32.totalorder %s15, 0
    %p192 = por %p190, %p191
    %p193 = scmp.ne.s32.totalorder %s185, %s187
    %p194 = scmp.eq.s32.totalorder %s20, 1
    %p195 = por %p193, %p194
    %p196 = scmp.ne.s32.totalorder %s187, %s188
    %p197 = scmp.eq.s32.totalorder %s20, 0
    %p198 = por %p196, %p197
    %p199 = scmp.ne.s32.totalorder %s187, %s188
    %p200 = scmp.eq.s32.totalorder %s21, 1
    %p201 = por %p199, %p200
    %p203 = scmp.ne.s32.totalorder %s188, %s202
    %p204 = scmp.eq.s32.totalorder %s21, 0
    %p205 = por %p203, %p204
    %s206 = ssub.s32 %s15, %s22
    %p207 = scmp.eq.s32.totalorder %s206, 0
    %s209 = sadd.s32 %s208, 1
    %s210 = scalar_select %p207, %s208, %s209
    %p213 = pneg %p207
    %p214 = scmp.eq.s32.totalorder %s15, 1
    %p215 = por %p213, %p214
    %p216 = scmp.ne.s32.totalorder %s208, %s211
    %p217 = scmp.eq.s32.totalorder %s15, 0
    %p218 = por %p216, %p217
    %p219 = scmp.ne.s32.totalorder %s208, %s211
    %p220 = scmp.eq.s32.totalorder %s20, 1
    %p221 = por %p219, %p220
    %p222 = scmp.ne.s32.totalorder %s211, %s212
    %p223 = scmp.eq.s32.totalorder %s20, 0
    %p224 = por %p222, %p223
    %p225 = scmp.ne.s32.totalorder %s211, %s212
    %p226 = scmp.eq.s32.totalorder %s21, 1
    %p227 = por %p225, %p226
    %p229 = scmp.ne.s32.totalorder %s212, %s228
    %p230 = scmp.eq.s32.totalorder %s21, 0
    %p231 = por %p229, %p230
    %p232 = scmp.le.s32.totalorder 1, %s15
    %p233 = scmp.lt.s32.totalorder %s15, 3
    %p234 = pnand %p232, %p233
    %p235 = pneg %p234
    // Predicated region
    $region9: #{lca11_forward.1} parent=5 // pred_check
      _
    $region10: #{lca11_forward.1} parent=5 // pred_check_branch
      %237 = sbr.rel (%p234) target = $region12
    $region11: #{lca11_forward.1} parent=5 // pred_region
      %s238 = ssub.s32 %s15, 1
      // Predicated region
      $region13: #{lca11_forward.1} parent=11 // pred_check
        %p239 = pneg %p114
      $region14: #{lca11_forward.1} parent=11 // pred_check_branch
        %241 = sbr.rel (%p239) target = $region16
      $region15: #{lca11_forward.1} parent=11 // pred_region
        _
      $region16: #{lca11_forward.1} parent=11 // pred_fallthru
        _
      // Predicated region
      $region17: #{lca11_forward.1} parent=11 // pred_check
        %p242 = pneg %p135
      $region18: #{lca11_forward.1} parent=11 // pred_check_branch
        %244 = sbr.rel (%p242) target = $region20
      $region19: #{lca11_forward.1} parent=11 // pred_region
        _
      $region20: #{lca11_forward.1} parent=11 // pred_fallthru
        _
      // Predicated region
      $region21: #{lca11_forward.1} parent=11 // pred_check
        %p245 = pneg %p156
      $region22: #{lca11_forward.1} parent=11 // pred_check_branch
        %247 = sbr.rel (%p245) target = $region24
      $region23: #{lca11_forward.1} parent=11 // pred_region
        _
      $region24: #{lca11_forward.1} parent=11 // pred_fallthru
        _
      // Predicated region
      $region25: #{lca11_forward.1} parent=11 // pred_check
        %p248 = pneg %p177
      $region26: #{lca11_forward.1} parent=11 // pred_check_branch
        %250 = sbr.rel (%p248) target = $region28
      $region27: #{lca11_forward.1} parent=11 // pred_region
        _
      $region28: #{lca11_forward.1} parent=11 // pred_fallthru
        _
      // Predicated region
      $region29: #{lca11_forward.1} parent=11 // pred_check
        %p251 = pneg %p198
      $region30: #{lca11_forward.1} parent=11 // pred_check_branch
        %253 = sbr.rel (%p251) target = $region32
      $region31: #{lca11_forward.1} parent=11 // pred_region
        _
      $region32: #{lca11_forward.1} parent=11 // pred_fallthru
        _
    $region12: #{lca11_forward.1} parent=5 // pred_fallthru
      _
    %p254 = scmp.lt.s32.totalorder %s15, 2
    // Predicated region
    $region33: #{lca11_forward.1} parent=5 // pred_check
      %p255 = pneg %p254
    $region34: #{lca11_forward.1} parent=5 // pred_check_branch
      %257 = sbr.rel (%p255) target = $region36
    $region35: #{lca11_forward.1} parent=5 // pred_region
      // Predicated region
      $region37: #{lca11_forward.1} parent=35 // pred_check
        %p258 = pneg %p35
      $region38: #{lca11_forward.1} parent=35 // pred_check_branch
        %260 = sbr.rel (%p258) target = $region40
      $region39: #{lca11_forward.1} parent=35 // pred_region
        %p261 = scmp.lt.s32.totalorder %s15, 1
        %s262 = scalar_select %p261, %s15, 1
        %s263 = smul.addr %s262, 16
        %s264 = smul.addr %s263, 8
        %s265 = scalar_lea.vmem %s0, %s264
      $region40: #{lca11_forward.1} parent=35 // pred_fallthru
        _
      // Predicated region
      $region41: #{lca11_forward.1} parent=35 // pred_check
        %p266 = pneg %p61
      $region42: #{lca11_forward.1} parent=35 // pred_check_branch
        %268 = sbr.rel (%p266) target = $region44
      $region43: #{lca11_forward.1} parent=35 // pred_region
        %p269 = scmp.lt.s32.totalorder %s15, 1
        %s270 = scalar_select %p269, %s15, 1
        %s271 = smul.addr %s270, 2
        %s272 = smul.addr %s271, 2
        %s273 = scalar_lea.vmem %s1, %s272
      $region44: #{lca11_forward.1} parent=35 // pred_fallthru
        _
      // Predicated region
      $region45: #{lca11_forward.1} parent=35 // pred_check
        %p274 = pneg %p87
      $region46: #{lca11_forward.1} parent=35 // pred_check_branch
        %276 = sbr.rel (%p274) target = $region48
      $region47: #{lca11_forward.1} parent=35 // pred_region
        %p277 = scmp.lt.s32.totalorder %s15, 1
        %s278 = scalar_select %p277, %s15, 1
        %s279 = smul.addr %s278, 8
        %s280 = smul.addr %s279, 8
        %s281 = scalar_lea.vmem %s2, %s280
      $region48: #{lca11_forward.1} parent=35 // pred_fallthru
        _
    $region36: #{lca11_forward.1} parent=5 // pred_fallthru
      _
    %p282 = scmp.le.s32.totalorder 1, %s15
    %p283 = scmp.lt.s32.totalorder %s15, 3
    %p284 = pnand %p282, %p283
    %p285 = pneg %p284
    // Predicated region
    $region49: #{lca11_forward.1} parent=5 // pred_check
      _
    $region50: #{lca11_forward.1} parent=5 // pred_check_branch
      %287 = sbr.rel (%p284) target = $region52
    $region51: #{lca11_forward.1} parent=5 // pred_region
      %s288 = ssub.s32 %s15, 1
      %p289 = scmp.lt.s32.totalorder %s20, 1
      %s290 = scalar_select %p289, %s20, 1
      %s291 = smul.addr %s290, 16
      %s292 = smul.addr %s291, 8
      %s293 = scalar_lea.vmem %s0, %s292
      %p294 = pneg %p41
      %p295 = pneg %p38
      %p296 = scmp.lt.s32.totalorder %s20, 1
      %s297 = scalar_select %p296, %s20, 1
      %s298 = smul.addr %s297, 2
      %s299 = smul.addr %s298, 2
      %s300 = scalar_lea.vmem %s1, %s299
      %p301 = pneg %p67
      %p302 = pneg %p64
      %p303 = scmp.lt.s32.totalorder %s20, 1
      %s304 = scalar_select %p303, %s20, 1
      %s305 = smul.addr %s304, 8
      %s306 = smul.addr %s305, 8
      %s307 = scalar_lea.vmem %s2, %s306
      %p308 = pneg %p93
      %p309 = pneg %p90
      %p310 = pneg %p114
      %p311 = pneg %p111
      %p312 = pneg %p135
      %p313 = pneg %p132
      %p314 = pneg %p156
      %p315 = pneg %p153
      %p316 = pneg %p177
      %p317 = pneg %p174
      %p318 = pneg %p198
      %p319 = pneg %p195
      %p320 = pneg %p224
      %p321 = pneg %p221
      %p322 = scmp.lt.s32.totalorder %s20, 1
      %s323 = scalar_select %p322, %s20, 1
      %s324 = smul.addr %s323, 16
      %s325 = smul.addr %s324, 8
      %s326 = scalar_lea.vmem %s8, %s325
      %p327 = scmp.lt.s32.totalorder %s20, 1
      %s328 = scalar_select %p327, %s20, 1
      %s329 = smul.addr %s328, 16
      %s330 = smul.addr %s329, 8
      %s331 = scalar_lea.vmem %s0, %s330
      %p332 = scmp.lt.s32.totalorder %s20, 1
      %s333 = scalar_select %p332, %s20, 1
      %s334 = smul.addr %s333, 2
      %s335 = smul.addr %s334, 2
      %s336 = scalar_lea.vmem %s1, %s335
      %p337 = scmp.lt.s32.totalorder %s20, 1
      %s338 = scalar_select %p337, %s20, 1
      %s339 = smul.addr %s338, 8
      %s340 = smul.addr %s339, 8
      %s341 = scalar_lea.vmem %s2, %s340
      %p342 = scmp.lt.s32.totalorder %s20, 1
      %s343 = scalar_select %p342, %s20, 1
      %s344 = smul.addr %s343, 16
      %s345 = smul.addr %s344, 8
      %s346 = scalar_lea.vmem %s8, %s345
      %v348 = vld [vmem:[%s331] sm:$0xff]
      %v349 = vld [vmem:[%s331 + $0x8] sm:$0xff]
      %v350 = vld [vmem:[%s331 + $0x10] sm:$0xff]
      %v351 = vld [vmem:[%s331 + $0x18] sm:$0xff]
      %v352 = vld [vmem:[%s331 + $0x20] sm:$0xff]
      %v353 = vld [vmem:[%s331 + $0x28] sm:$0xff]
      %v354 = vld [vmem:[%s331 + $0x30] sm:$0xff]
      %v355 = vld [vmem:[%s331 + $0x38] sm:$0xff]
      %v356 = vld [vmem:[%s331 + $0x40] sm:$0xff]
      %v357 = vld [vmem:[%s331 + $0x48] sm:$0xff]
      %v358 = vld [vmem:[%s331 + $0x50] sm:$0xff]
      %v359 = vld [vmem:[%s331 + $0x58] sm:$0xff]
      %v360 = vld [vmem:[%s331 + $0x60] sm:$0xff]
      %v361 = vld [vmem:[%s331 + $0x68] sm:$0xff]
      %v362 = vld [vmem:[%s331 + $0x70] sm:$0xff]
      %v363 = vld [vmem:[%s331 + $0x78] sm:$0xff]
      %v364 = vmax.f32 %v348, %v349
      %365 = vmax.xlane.f32.xlu0 %v364
      %v366 = vpop.xlane.xlu0 %365
      %v367 = vmax.f32 %v350, %v351
      %368 = vmax.xlane.f32.xlu0 %v367
      %v369 = vpop.xlane.xlu0 %368
      %v370 = vmax.f32 %v352, %v353
      %371 = vmax.xlane.f32.xlu0 %v370
      %v372 = vpop.xlane.xlu0 %371
      %v373 = vmax.f32 %v354, %v355
      %374 = vmax.xlane.f32.xlu0 %v373
      %v375 = vpop.xlane.xlu0 %374
      %v376 = vmax.f32 %v356, %v357
      %377 = vmax.xlane.f32.xlu0 %v376
      %v378 = vpop.xlane.xlu0 %377
      %v379 = vmax.f32 %v358, %v359
      %380 = vmax.xlane.f32.xlu0 %v379
      %v381 = vpop.xlane.xlu0 %380
      %v382 = vmax.f32 %v360, %v361
      %383 = vmax.xlane.f32.xlu0 %v382
      %v384 = vpop.xlane.xlu0 %383
      %v385 = vmax.f32 %v362, %v363
      %386 = vmax.xlane.f32.xlu0 %v385
      %v387 = vpop.xlane.xlu0 %386
      %v388 = vadd.f32 %v348, %v349
      %389 = vadd.xlane.f32.xlu0 %v388
      %v390 = vpop.xlane.xlu0 %389
      %v391 = vadd.f32 %v350, %v351
      %392 = vadd.xlane.f32.xlu0 %v391
      %v393 = vpop.xlane.xlu0 %392
      %v394 = vadd.f32 %v352, %v353
      %395 = vadd.xlane.f32.xlu0 %v394
      %v396 = vpop.xlane.xlu0 %395
      %v397 = vadd.f32 %v354, %v355
      %398 = vadd.xlane.f32.xlu0 %v397
      %v399 = vpop.xlane.xlu0 %398
      %v400 = vadd.f32 %v356, %v357
      %401 = vadd.xlane.f32.xlu0 %v400
      %v402 = vpop.xlane.xlu0 %401
      %v403 = vadd.f32 %v358, %v359
      %404 = vadd.xlane.f32.xlu0 %v403
      %v405 = vpop.xlane.xlu0 %404
      %v406 = vadd.f32 %v360, %v361
      %407 = vadd.xlane.f32.xlu0 %v406
      %v408 = vpop.xlane.xlu0 %407
      %v409 = vadd.f32 %v362, %v363
      %410 = vadd.xlane.f32.xlu0 %v409
      %v411 = vpop.xlane.xlu0 %410
      %v412 = vrcp.pop 256.0
      %v413 = vmul.f32 %v390, %v412
      %v414 = vmul.f32 %v393, %v412
      %v415 = vmul.f32 %v396, %v412
      %v416 = vmul.f32 %v399, %v412
      %v417 = vmul.f32 %v402, %v412
      %v418 = vmul.f32 %v405, %v412
      %v419 = vmul.f32 %v408, %v412
      %v420 = vmul.f32 %v411, %v412
      %v429 = vlaneseq
      %v430 = vand.u32 %v429, 127
      %v431 = vlaneseq
      %v432 = vshrl.u32 %v431, 7
      %v433 = vsub.s32 %v430, %v432
      %v434 = vrot.slane %v366, %v433
      %v435 = vadd.s32 %v430, 4294967288
      %v436 = vlaneseq
      %v437 = vshrl.u32 %v436, 7
      %v438 = vsub.s32 %v435, %v437
      %v439 = vrot.slane %v369, %v438
      %vm440 = vcmask 130112
      %v441 = vsel %vm440, %v439, %v434
      %v442 = vadd.s32 %v430, 4294967280
      %v443 = vlaneseq
      %v444 = vshrl.u32 %v443, 7
      %v445 = vsub.s32 %v442, %v444
      %v446 = vrot.slane %v372, %v445
      %vm447 = vcmask 195712
      %v448 = vsel %vm447, %v446, %v441
      %v449 = vadd.s32 %v430, 4294967272
      %v450 = vlaneseq
      %v451 = vshrl.u32 %v450, 7
      %v452 = vsub.s32 %v449, %v451
      %v453 = vrot.slane %v375, %v452
      %vm454 = vcmask 261312
      %v455 = vsel %vm454, %v453, %v448
      %v456 = vlaneseq
      %v457 = vshrl.u32 %v456, 7
      %v458 = vsub.s32 %v430, %v457
      %v459 = vrot.slane %v378, %v458
      %v460 = vlaneseq
      %v461 = vshrl.u32 %v460, 7
      %v462 = vsub.s32 %v435, %v461
      %v463 = vrot.slane %v381, %v462
      %v464 = vsel %vm440, %v463, %v459
      %v465 = vlaneseq
      %v466 = vshrl.u32 %v465, 7
      %v467 = vsub.s32 %v442, %v466
      %v468 = vrot.slane %v384, %v467
      %v469 = vsel %vm447, %v468, %v464
      %v470 = vlaneseq
      %v471 = vshrl.u32 %v470, 7
      %v472 = vsub.s32 %v449, %v471
      %v473 = vrot.slane %v387, %v472
      %v474 = vsel %vm454, %v473, %v469
      %vm475 = vcmask 1041409
      %v476 = vsel %vm475, %v474, %v455
      %v486 = vlaneseq
      %v487 = vshrl.u32 %v486, 7
      %v488 = vsub.s32 %v430, %v487
      %v489 = vrot.slane %v413, %v488
      %v490 = vlaneseq
      %v491 = vshrl.u32 %v490, 7
      %v492 = vsub.s32 %v435, %v491
      %v493 = vrot.slane %v414, %v492
      %v494 = vsel %vm440, %v493, %v489
      %v495 = vlaneseq
      %v496 = vshrl.u32 %v495, 7
      %v497 = vsub.s32 %v442, %v496
      %v498 = vrot.slane %v415, %v497
      %v499 = vsel %vm447, %v498, %v494
      %v500 = vlaneseq
      %v501 = vshrl.u32 %v500, 7
      %v502 = vsub.s32 %v449, %v501
      %v503 = vrot.slane %v416, %v502
      %v504 = vsel %vm454, %v503, %v499
      %v505 = vlaneseq
      %v506 = vshrl.u32 %v505, 7
      %v507 = vsub.s32 %v430, %v506
      %v508 = vrot.slane %v417, %v507
      %v509 = vlaneseq
      %v510 = vshrl.u32 %v509, 7
      %v511 = vsub.s32 %v435, %v510
      %v512 = vrot.slane %v418, %v511
      %v513 = vsel %vm440, %v512, %v508
      %v514 = vlaneseq
      %v515 = vshrl.u32 %v514, 7
      %v516 = vsub.s32 %v442, %v515
      %v517 = vrot.slane %v419, %v516
      %v518 = vsel %vm447, %v517, %v513
      %v519 = vlaneseq
      %v520 = vshrl.u32 %v519, 7
      %v521 = vsub.s32 %v449, %v520
      %v522 = vrot.slane %v420, %v521
      %v523 = vsel %vm454, %v522, %v518
      %vm524 = vcmask 1043459
      %v525 = vsel %vm524, %v523, %v504
      %vm527 = vcmask 1041408
      %v528 = vsel %vm527, %v476, %v525
      %v529 = vld [vmem:[%s3] sm:$0xff]
      %v530 = vld [vmem:[%s3 + $0x8] sm:$0xff]
      %v531 = vld [vmem:[%s3 + $0x10] sm:$0xff]
      %v532 = vld [vmem:[%s3 + $0x18] sm:$0xff]
      %vm533 = vcmask 261120
      %v535 = vsel %vm533, %v528, 0
      %537 = vmatprep.subr.mxu0 0.0
      %538 = vmatpush1.msra.mxu0 %v529
      %539 = vmatprep.subr.mxu0 0.0
      %540 = vmatpush1.msra.mxu0 %v530
      %541 = vmatprep.subr.mxu0 0.0
      %542 = vmatpush1.msra.mxu0 %v531
      %543 = vmatprep.subr.mxu0 0.0
      %544 = vmatpush1.msra.mxu0 %v532
      %545 = vmatprep.subr.mxu0 0.0
      %546 = vmatpush1.msra.mxu0 0.0
      %547 = vmatprep.subr.mxu0 0.0
      %548 = vmatpush1.msra.mxu0 0.0
      %549 = vmatprep.subr.mxu0 0.0
      %550 = vmatpush1.msra.mxu0 0.0
      %551 = vmatprep.subr.mxu0 0.0
      %552 = vmatpush1.msra.mxu0 0.0
      %553 = vmatprep.subr.mxu0 0.0
      %554 = vmatpush1.msra.mxu0 0.0
      %555 = vmatprep.subr.mxu0 0.0
      %556 = vmatpush1.msra.mxu0 0.0
      %557 = vmatprep.subr.mxu0 0.0
      %558 = vmatpush1.msra.mxu0 0.0
      %559 = vmatprep.subr.mxu0 0.0
      %560 = vmatpush1.msra.mxu0 0.0
      %561 = vmatprep.subr.mxu0 0.0
      %562 = vmatpush1.msra.mxu0 0.0
      %563 = vmatprep.subr.mxu0 0.0
      %564 = vmatpush1.msra.mxu0 0.0
      %565 = vmatprep.subr.mxu0 0.0
      %566 = vmatpush1.msra.mxu0 0.0
      %567 = vmatprep.subr.mxu0 0.0
      %568 = vmatpush1.msra.mxu0 0.0
      %569 = vmatprep.subr.mxu0 0.0
      %570 = vmatpush1.msra.mxu0 0.0
      %571 = vmatprep.subr.mxu0 0.0
      %572 = vmatpush1.msra.mxu0 0.0
      %573 = vmatprep.subr.mxu0 0.0
      %574 = vmatpush1.msra.mxu0 0.0
      %575 = vmatprep.subr.mxu0 0.0
      %576 = vmatpush1.msra.mxu0 0.0
      %577 = vmatprep.subr.mxu0 0.0
      %578 = vmatpush1.msra.mxu0 0.0
      %579 = vmatprep.subr.mxu0 0.0
      %580 = vmatpush1.msra.mxu0 0.0
      %581 = vmatprep.subr.mxu0 0.0
      %582 = vmatpush1.msra.mxu0 0.0
      %583 = vmatprep.subr.mxu0 0.0
      %584 = vmatpush1.msra.mxu0 0.0
      %585 = vmatprep.subr.mxu0 0.0
      %586 = vmatpush1.msra.mxu0 0.0
      %587 = vmatprep.subr.mxu0 0.0
      %588 = vmatpush1.msra.mxu0 0.0
      %589 = vmatprep.subr.mxu0 0.0
      %590 = vmatpush1.msra.mxu0 0.0
      %591 = vmatprep.subr.mxu0 0.0
      %592 = vmatpush1.msra.mxu0 0.0
      %593 = vmatprep.subr.mxu0 0.0
      %594 = vmatpush1.msra.mxu0 0.0
      %595 = vmatprep.subr.mxu0 0.0
      %596 = vmatpush1.msra.mxu0 0.0
      %597 = vmatprep.subr.mxu0 0.0
      %598 = vmatpush1.msra.mxu0 0.0
      %599 = vmatprep.subr.mxu0 0.0
      %600 = vmatpush1.msra.mxu0 0.0
      %601 = vmatprep.mubr.f32.mxu0 0.0
      %602 = vmatmul.mubr.f32.gmra.mrb[0].mxu0 %v535
      %v603 = vpop.f32.mrb[0].mxu0
      %v604 = vadd.f32 0.0, %v603
      %v605 = vpop.f32.mrb[0].mxu0
      %606 = vdwg.mxu0
      %v607 = vmax.f32 %v604, 0.0
      %v608 = vld [vmem:[%s4] sm:$0x3]
      %vm609 = vcmask 15360
      %v611 = vsel %vm609, %v607, 0
      %v614 = vsel %vm527, %v608, 0
      %616 = vmatprep.subr.mxu0 0.0
      %617 = vmatpush1.msra.mxu0 %v614
      %618 = vmatprep.subr.mxu0 0.0
      %619 = vmatpush1.msra.mxu0 0.0
      %620 = vmatprep.subr.mxu0 0.0
      %621 = vmatpush1.msra.mxu0 0.0
      %622 = vmatprep.subr.mxu0 0.0
      %623 = vmatpush1.msra.mxu0 0.0
      %624 = vmatprep.subr.mxu0 0.0
      %625 = vmatpush1.msra.mxu0 0.0
      %626 = vmatprep.subr.mxu0 0.0
      %627 = vmatpush1.msra.mxu0 0.0
      %628 = vmatprep.subr.mxu0 0.0
      %629 = vmatpush1.msra.mxu0 0.0
      %630 = vmatprep.subr.mxu0 0.0
      %631 = vmatpush1.msra.mxu0 0.0
      %632 = vmatprep.subr.mxu0 0.0
      %633 = vmatpush1.msra.mxu0 0.0
      %634 = vmatprep.subr.mxu0 0.0
      %635 = vmatpush1.msra.mxu0 0.0
      %636 = vmatprep.subr.mxu0 0.0
      %637 = vmatpush1.msra.mxu0 0.0
      %638 = vmatprep.subr.mxu0 0.0
      %639 = vmatpush1.msra.mxu0 0.0
      %640 = vmatprep.subr.mxu0 0.0
      %641 = vmatpush1.msra.mxu0 0.0
      %642 = vmatprep.subr.mxu0 0.0
      %643 = vmatpush1.msra.mxu0 0.0
      %644 = vmatprep.subr.mxu0 0.0
      %645 = vmatpush1.msra.mxu0 0.0
      %646 = vmatprep.subr.mxu0 0.0
      %647 = vmatpush1.msra.mxu0 0.0
      %648 = vmatprep.subr.mxu0 0.0
      %649 = vmatpush1.msra.mxu0 0.0
      %650 = vmatprep.subr.mxu0 0.0
      %651 = vmatpush1.msra.mxu0 0.0
      %652 = vmatprep.subr.mxu0 0.0
      %653 = vmatpush1.msra.mxu0 0.0
      %654 = vmatprep.subr.mxu0 0.0
      %655 = vmatpush1.msra.mxu0 0.0
      %656 = vmatprep.subr.mxu0 0.0
      %657 = vmatpush1.msra.mxu0 0.0
      %658 = vmatprep.subr.mxu0 0.0
      %659 = vmatpush1.msra.mxu0 0.0
      %660 = vmatprep.subr.mxu0 0.0
      %661 = vmatpush1.msra.mxu0 0.0
      %662 = vmatprep.subr.mxu0 0.0
      %663 = vmatpush1.msra.mxu0 0.0
      %664 = vmatprep.subr.mxu0 0.0
      %665 = vmatpush1.msra.mxu0 0.0
      %666 = vmatprep.subr.mxu0 0.0
      %667 = vmatpush1.msra.mxu0 0.0
      %668 = vmatprep.subr.mxu0 0.0
      %669 = vmatpush1.msra.mxu0 0.0
      %670 = vmatprep.subr.mxu0 0.0
      %671 = vmatpush1.msra.mxu0 0.0
      %672 = vmatprep.subr.mxu0 0.0
      %673 = vmatpush1.msra.mxu0 0.0
      %674 = vmatprep.subr.mxu0 0.0
      %675 = vmatpush1.msra.mxu0 0.0
      %676 = vmatprep.subr.mxu0 0.0
      %677 = vmatpush1.msra.mxu0 0.0
      %678 = vmatprep.subr.mxu0 0.0
      %679 = vmatpush1.msra.mxu0 0.0
      %680 = vmatprep.mubr.f32.mxu0 0.0
      %681 = vmatmul.mubr.f32.gmra.mrb[0].mxu0 %v611
      %v682 = vpop.f32.mrb[0].mxu0
      %v683 = vadd.f32 0.0, %v682
      %v684 = vpop.f32.mrb[0].mxu0
      %685 = vdwg.mxu0
      %v687 = vrot.slane %v683, 2
      %v689 = vadd.f32 %v683, %v687
      %v690 = vxor.u32 %v689, 2147483648
      %v691 = vmul.f32 %v690, 1.442695
      %v692 = vpow.pop %v691
      %v693 = vadd.f32 %v692, 1.0
      %v694 = vrcp.pop %v693
      %v695 = vmul.f32 1.0, %v694
      %v696 = vlaneseq
      %v697 = vshrl.u32 %v696, 7
      %v698 = vsub.s32 0, %v697
      %v699 = vrot.slane %v695, %v698
      %701 = vbcast.lane.b32.xlu0 %v699, 256
      %v702 = vpop.permute.xlu0 %701
      %s704 = sor.u32 256, 8
      %705 = vbcast.lane.b32.xlu0 %v699, %s704
      %v706 = vpop.permute.xlu0 %705
      %s708 = sor.u32 256, 16
      %709 = vbcast.lane.b32.xlu0 %v699, %s708
      %v710 = vpop.permute.xlu0 %709
      %s712 = sor.u32 256, 24
      %713 = vbcast.lane.b32.xlu0 %v699, %s712
      %v714 = vpop.permute.xlu0 %713
      %v715 = vlaneseq
      %v716 = vshrl.u32 %v715, 7
      %v717 = vsub.s32 1, %v716
      %v718 = vrot.slane %v695, %v717
      %720 = vbcast.lane.b32.xlu0 %v718, 256
      %v721 = vpop.permute.xlu0 %720
      %s723 = sor.u32 256, 8
      %724 = vbcast.lane.b32.xlu0 %v718, %s723
      %v725 = vpop.permute.xlu0 %724
      %s727 = sor.u32 256, 16
      %728 = vbcast.lane.b32.xlu0 %v718, %s727
      %v729 = vpop.permute.xlu0 %728
      %s731 = sor.u32 256, 24
      %732 = vbcast.lane.b32.xlu0 %v718, %s731
      %v733 = vpop.permute.xlu0 %732
      %v734 = vmul.f32 %v348, %v702
      %v735 = vmul.f32 %v349, %v702
      %v736 = vmul.f32 %v350, %v706
      %v737 = vmul.f32 %v351, %v706
      %v738 = vmul.f32 %v352, %v710
      %v739 = vmul.f32 %v353, %v710
      %v740 = vmul.f32 %v354, %v714
      %v741 = vmul.f32 %v355, %v714
      %v742 = vmul.f32 %v356, %v721
      %v743 = vmul.f32 %v357, %v721
      %v744 = vmul.f32 %v358, %v725
      %v745 = vmul.f32 %v359, %v725
      %v746 = vmul.f32 %v360, %v729
      %v747 = vmul.f32 %v361, %v729
      %v748 = vmul.f32 %v362, %v733
      %v749 = vmul.f32 %v363, %v733
      %v750 = vld [vmem:[%s336] sm:$0xf]
      %v751 = vxor.u32 %v750, 2147483648
      %v752 = vmul.f32 %v751, 1.442695
      %v753 = vpow.pop %v752
      %v754 = vadd.f32 %v753, 1.0
      %v755 = vrcp.pop %v754
      %v756 = vmul.f32 1.0, %v755
      %v757 = vsub.f32 %v756, 0.5
      %v758 = vand.u32 2147483647, %v757
      %v759 = vmul.f32 %v758, 2.0
      %v760 = vsub.f32 1.0, %v759
      %v763 = vunpack.c.l.s4 1966171168
      %v764 = vunpack.c.0.s8 %v763
      %v765 = vlaneseq
      %v766 = vshrl.u32 %v765, 7
      %v767 = vsub.s32 %v764, %v766
      %v768 = vrot.slane %v760, %v767
      %v769 = vcombine.high %v768, %v768
      %v770 = vlaneseq
      %v771 = vshrl.u32 %v770, 7
      %v772 = vsub.s32 0, %v771
      %v773 = vrot.slane %v768, %v772
      %v774 = vlaneseq
      %v775 = vshrl.u32 %v774, 7
      %v776 = vsub.s32 1, %v775
      %v777 = vrot.slane %v768, %v776
      %v778 = vlaneseq
      %v779 = vshrl.u32 %v778, 7
      %v780 = vsub.s32 0, %v779
      %v781 = vrot.slane %v769, %v780
      %v782 = vlaneseq
      %v783 = vshrl.u32 %v782, 7
      %v784 = vsub.s32 1, %v783
      %v785 = vrot.slane %v769, %v784
      %v790 = vmul.f32 %v734, %v773
      %v791 = vmul.f32 %v735, %v777
      %v792 = vmul.f32 %v736, %v773
      %v793 = vmul.f32 %v737, %v777
      %v794 = vmul.f32 %v738, %v773
      %v795 = vmul.f32 %v739, %v777
      %v796 = vmul.f32 %v740, %v773
      %v797 = vmul.f32 %v741, %v777
      %v798 = vmul.f32 %v742, %v781
      %v799 = vmul.f32 %v743, %v785
      %v800 = vmul.f32 %v744, %v781
      %v801 = vmul.f32 %v745, %v785
      %v802 = vmul.f32 %v746, %v781
      %v803 = vmul.f32 %v747, %v785
      %v804 = vmul.f32 %v748, %v781
      %v805 = vmul.f32 %v749, %v785
      %v806 = vld [vmem:[%s341] sm:$0xff]
      %v807 = vld [vmem:[%s341 + $0x8] sm:$0xff]
      %v808 = vld [vmem:[%s341 + $0x10] sm:$0xff]
      %v809 = vld [vmem:[%s341 + $0x18] sm:$0xff]
      %v810 = vld [vmem:[%s341 + $0x20] sm:$0xff]
      %v811 = vld [vmem:[%s341 + $0x28] sm:$0xff]
      %v812 = vld [vmem:[%s341 + $0x30] sm:$0xff]
      %v813 = vld [vmem:[%s341 + $0x38] sm:$0xff]
      %v814 = vpack.c.bf16 %v807, %v806
      %v815 = vpack.c.bf16 %v809, %v808
      %v816 = vpack.c.bf16 %v811, %v810
      %v817 = vpack.c.bf16 %v813, %v812
      %v818 = vld [vmem:[%s5] sm:$0xff]
      %v819 = vld [vmem:[%s5 + $0x8] sm:$0xff]
      %v820 = vld [vmem:[%s5 + $0x10] sm:$0xff]
      %v821 = vld [vmem:[%s5 + $0x18] sm:$0xff]
      %v822 = vld [vmem:[%s5 + $0x20] sm:$0xff]
      %v823 = vld [vmem:[%s5 + $0x28] sm:$0xff]
      %v824 = vld [vmem:[%s5 + $0x30] sm:$0xff]
      %v825 = vld [vmem:[%s5 + $0x38] sm:$0xff]
      %v834 = vunpack.c.l.b16 %v818
      %v835 = vunpack.c.h.b16 %v818
      %v836 = vunpack.c.l.b16 %v819
      %v837 = vunpack.c.h.b16 %v819
      %v838 = vunpack.c.l.b16 %v820
      %v839 = vunpack.c.h.b16 %v820
      %v840 = vunpack.c.l.b16 %v821
      %v841 = vunpack.c.h.b16 %v821
      %v842 = vunpack.c.l.b16 %v822
      %v843 = vunpack.c.h.b16 %v822
      %v844 = vunpack.c.l.b16 %v823
      %v845 = vunpack.c.h.b16 %v823
      %v846 = vunpack.c.l.b16 %v824
      %v847 = vunpack.c.h.b16 %v824
      %v848 = vunpack.c.l.b16 %v825
      %v849 = vunpack.c.h.b16 %v825
      %v850 = vpack.c.b16 %v836, %v834
      %v851 = vpack.c.b16 %v837, %v835
      %v852 = vpack.c.b16 %v840, %v838
      %v853 = vpack.c.b16 %v841, %v839
      %v854 = vpack.c.b16 %v844, %v842
      %v855 = vpack.c.b16 %v845, %v843
      %v856 = vpack.c.b16 %v848, %v846
      %v857 = vpack.c.b16 %v849, %v847
      %vm866 = vcmask 523264
      %v868 = vsel %vm866, %v814, 0
      %v871 = vsel %vm866, %v815, 0
      %v874 = vsel %vm866, %v816, 0
      %v877 = vsel %vm866, %v817, 0
      %879 = vmatprep.subr.bf16.mxu0 %v851
      %880 = vmatpush1.bf16.msra.mxu0 %v850
      %881 = vmatprep.subr.bf16.mxu0 %v853
      %882 = vmatpush1.bf16.msra.mxu0 %v852
      %883 = vmatprep.subr.bf16.mxu0 %v855
      %884 = vmatpush1.bf16.msra.mxu0 %v854
      %885 = vmatprep.subr.bf16.mxu0 %v857
      %886 = vmatpush1.bf16.msra.mxu0 %v856
      %887 = vmatprep.subr.bf16.mxu0 0
      %888 = vmatpush1.bf16.msra.mxu0 0
      %889 = vmatprep.subr.bf16.mxu0 0
      %890 = vmatpush1.bf16.msra.mxu0 0
      %891 = vmatprep.subr.bf16.mxu0 0
      %892 = vmatpush1.bf16.msra.mxu0 0
      %893 = vmatprep.subr.bf16.mxu0 0
      %894 = vmatpush1.bf16.msra.mxu0 0
      %895 = vmatprep.subr.bf16.mxu0 0
      %896 = vmatpush1.bf16.msra.mxu0 0
      %897 = vmatprep.subr.bf16.mxu0 0
      %898 = vmatpush1.bf16.msra.mxu0 0
      %899 = vmatprep.subr.bf16.mxu0 0
      %900 = vmatpush1.bf16.msra.mxu0 0
      %901 = vmatprep.subr.bf16.mxu0 0
      %902 = vmatpush1.bf16.msra.mxu0 0
      %903 = vmatprep.subr.bf16.mxu0 0
      %904 = vmatpush1.bf16.msra.mxu0 0
      %905 = vmatprep.subr.bf16.mxu0 0
      %906 = vmatpush1.bf16.msra.mxu0 0
      %907 = vmatprep.subr.bf16.mxu0 0
      %908 = vmatpush1.bf16.msra.mxu0 0
      %909 = vmatprep.subr.bf16.mxu0 0
      %910 = vmatpush1.bf16.msra.mxu0 0
      %911 = vmatprep.mubr.bf16.mxu0 0
      %912 = vmatmul.mubr.bf16.gmra.mrb[0].mxu0 %v868
      %v913 = vpop.f32.mrb[0].mxu0
      %v914 = vadd.f32 0.0, %v913
      %v915 = vpop.f32.mrb[0].mxu0
      %v916 = vadd.f32 0.0, %v915
      %v917 = vpop.f32.mrb[0].mxu0
      %v918 = vadd.f32 0.0, %v917
      %v919 = vpop.f32.mrb[0].mxu0
      %v920 = vadd.f32 0.0, %v919
      %921 = vmatprep.mubr.bf16.mxu0 0
      %922 = vmatmul.mubr.bf16.gmra.mrb[0].mxu0 %v871
      %v923 = vpop.f32.mrb[0].mxu0
      %v924 = vadd.f32 0.0, %v923
      %v925 = vpop.f32.mrb[0].mxu0
      %v926 = vadd.f32 0.0, %v925
      %v927 = vpop.f32.mrb[0].mxu0
      %v928 = vadd.f32 0.0, %v927
      %v929 = vpop.f32.mrb[0].mxu0
      %v930 = vadd.f32 0.0, %v929
      %931 = vmatprep.mubr.bf16.mxu0 0
      %932 = vmatmul.mubr.bf16.gmra.mrb[0].mxu0 %v874
      %v933 = vpop.f32.mrb[0].mxu0
      %v934 = vadd.f32 0.0, %v933
      %v935 = vpop.f32.mrb[0].mxu0
      %v936 = vadd.f32 0.0, %v935
      %v937 = vpop.f32.mrb[0].mxu0
      %v938 = vadd.f32 0.0, %v937
      %v939 = vpop.f32.mrb[0].mxu0
      %v940 = vadd.f32 0.0, %v939
      %941 = vmatprep.mubr.bf16.mxu0 0
      %942 = vmatmul.mubr.bf16.gmra.mrb[0].mxu0 %v877
      %v943 = vpop.f32.mrb[0].mxu0
      %v944 = vadd.f32 0.0, %v943
      %v945 = vpop.f32.mrb[0].mxu0
      %v946 = vadd.f32 0.0, %v945
      %v947 = vpop.f32.mrb[0].mxu0
      %v948 = vadd.f32 0.0, %v947
      %v949 = vpop.f32.mrb[0].mxu0
      %v950 = vadd.f32 0.0, %v949
      %951 = vdwg.mxu0
      %v952 = vadd.f32 %v790, %v914
      %v953 = vadd.f32 %v791, %v916
      %v954 = vadd.f32 %v792, %v918
      %v955 = vadd.f32 %v793, %v920
      %v956 = vadd.f32 %v794, %v924
      %v957 = vadd.f32 %v795, %v926
      %v958 = vadd.f32 %v796, %v928
      %v959 = vadd.f32 %v797, %v930
      %v960 = vadd.f32 %v798, %v934
      %v961 = vadd.f32 %v799, %v936
      %v962 = vadd.f32 %v800, %v938
      %v963 = vadd.f32 %v801, %v940
      %v964 = vadd.f32 %v802, %v944
      %v965 = vadd.f32 %v803, %v946
      %v966 = vadd.f32 %v804, %v948
      %v967 = vadd.f32 %v805, %v950
      %v968 = vmax.f32 %v952, %v954
      %v969 = vmax.f32 %v968, %v956
      %v970 = vmax.f32 %v969, %v958
      %v971 = vrot.slane %v970, 4
      %v972 = vmax.f32 %v970, %v971
      %v973 = vrot.slane %v972, 2
      %v974 = vmax.f32 %v972, %v973
      %v975 = vrot.slane %v974, 1
      %v976 = vmax.f32 %v974, %v975
      %v977 = vmax.f32 %v953, %v955
      %v978 = vmax.f32 %v977, %v957
      %v979 = vmax.f32 %v978, %v959
      %v980 = vrot.slane %v979, 4
      %v981 = vmax.f32 %v979, %v980
      %v982 = vrot.slane %v981, 2
      %v983 = vmax.f32 %v981, %v982
      %v984 = vrot.slane %v983, 1
      %v985 = vmax.f32 %v983, %v984
      %v986 = vmax.f32 %v960, %v962
      %v987 = vmax.f32 %v986, %v964
      %v988 = vmax.f32 %v987, %v966
      %v989 = vrot.slane %v988, 4
      %v990 = vmax.f32 %v988, %v989
      %v991 = vrot.slane %v990, 2
      %v992 = vmax.f32 %v990, %v991
      %v993 = vrot.slane %v992, 1
      %v994 = vmax.f32 %v992, %v993
      %v995 = vmax.f32 %v961, %v963
      %v996 = vmax.f32 %v995, %v965
      %v997 = vmax.f32 %v996, %v967
      %v998 = vrot.slane %v997, 4
      %v999 = vmax.f32 %v997, %v998
      %v1000 = vrot.slane %v999, 2
      %v1001 = vmax.f32 %v999, %v1000
      %v1002 = vrot.slane %v1001, 1
      %v1003 = vmax.f32 %v1001, %v1002
      %v1004 = vadd.f32 %v952, %v954
      %v1005 = vadd.f32 %v1004, %v956
      %v1006 = vadd.f32 %v1005, %v958
      %v1007 = vrot.slane %v1006, 4
      %v1008 = vadd.f32 %v1006, %v1007
      %v1009 = vrot.slane %v1008, 2
      %v1010 = vadd.f32 %v1008, %v1009
      %v1011 = vrot.slane %v1010, 1
      %v1012 = vadd.f32 %v1010, %v1011
      %v1013 = vadd.f32 %v953, %v955
      %v1014 = vadd.f32 %v1013, %v957
      %v1015 = vadd.f32 %v1014, %v959
      %v1016 = vrot.slane %v1015, 4
      %v1017 = vadd.f32 %v1015, %v1016
      %v1018 = vrot.slane %v1017, 2
      %v1019 = vadd.f32 %v1017, %v1018
      %v1020 = vrot.slane %v1019, 1
      %v1021 = vadd.f32 %v1019, %v1020
      %v1022 = vadd.f32 %v960, %v962
      %v1023 = vadd.f32 %v1022, %v964
      %v1024 = vadd.f32 %v1023, %v966
      %v1025 = vrot.slane %v1024, 4
      %v1026 = vadd.f32 %v1024, %v1025
      %v1027 = vrot.slane %v1026, 2
      %v1028 = vadd.f32 %v1026, %v1027
      %v1029 = vrot.slane %v1028, 1
      %v1030 = vadd.f32 %v1028, %v1029
      %v1031 = vadd.f32 %v961, %v963
      %v1032 = vadd.f32 %v1031, %v965
      %v1033 = vadd.f32 %v1032, %v967
      %v1034 = vrot.slane %v1033, 4
      %v1035 = vadd.f32 %v1033, %v1034
      %v1036 = vrot.slane %v1035, 2
      %v1037 = vadd.f32 %v1035, %v1036
      %v1038 = vrot.slane %v1037, 1
      %v1039 = vadd.f32 %v1037, %v1038
      %v1040 = vrcp.pop 32.0
      %v1041 = vmul.f32 %v1012, %v1040
      %v1042 = vmul.f32 %v1021, %v1040
      %v1043 = vmul.f32 %v1030, %v1040
      %v1044 = vmul.f32 %v1039, %v1040
      %v1049 = vsel %vm475, %v994, %v976
      %v1050 = vsel %vm475, %v1003, %v985
      %v1057 = vsel %vm475, %v1043, %v1041
      %v1058 = vsel %vm475, %v1044, %v1042
      %v1061 = vld [vmem:[%s6] sm:$0xff]
      %v1062 = vld [vmem:[%s6 + $0x8] sm:$0xff]
      %v1063 = vld [vmem:[%s6 + $0x10] sm:$0xff]
      %v1064 = vld [vmem:[%s6 + $0x18] sm:$0xff]
      %v1065 = vld [vmem:[%s6 + $0x20] sm:$0xff]
      %v1066 = vld [vmem:[%s6 + $0x28] sm:$0xff]
      %v1067 = vld [vmem:[%s6 + $0x30] sm:$0xff]
      %v1068 = vld [vmem:[%s6 + $0x38] sm:$0xff]
      %v1069 = vld [vmem:[%s6 + $0x40] sm:$0xff]
      %v1070 = vld [vmem:[%s6 + $0x48] sm:$0xff]
      %v1071 = vld [vmem:[%s6 + $0x50] sm:$0xff]
      %v1072 = vld [vmem:[%s6 + $0x58] sm:$0xff]
      %v1073 = vld [vmem:[%s6 + $0x60] sm:$0xff]
      %v1074 = vld [vmem:[%s6 + $0x68] sm:$0xff]
      %v1075 = vld [vmem:[%s6 + $0x70] sm:$0xff]
      %v1076 = vld [vmem:[%s6 + $0x78] sm:$0xff]
      %v1077 = vld [vmem:[%s6 + $0x80] sm:$0xff]
      %v1078 = vld [vmem:[%s6 + $0x88] sm:$0xff]
      %v1079 = vld [vmem:[%s6 + $0x90] sm:$0xff]
      %v1080 = vld [vmem:[%s6 + $0x98] sm:$0xff]
      %v1081 = vld [vmem:[%s6 + $0xa0] sm:$0xff]
      %v1082 = vld [vmem:[%s6 + $0xa8] sm:$0xff]
      %v1083 = vld [vmem:[%s6 + $0xb0] sm:$0xff]
      %v1084 = vld [vmem:[%s6 + $0xb8] sm:$0xff]
      %v1085 = vld [vmem:[%s6 + $0xc0] sm:$0xff]
      %v1086 = vld [vmem:[%s6 + $0xc8] sm:$0xff]
      %v1087 = vld [vmem:[%s6 + $0xd0] sm:$0xff]
      %v1088 = vld [vmem:[%s6 + $0xd8] sm:$0xff]
      %v1089 = vld [vmem:[%s6 + $0xe0] sm:$0xff]
      %v1090 = vld [vmem:[%s6 + $0xe8] sm:$0xff]
      %v1091 = vld [vmem:[%s6 + $0xf0] sm:$0xff]
      %v1092 = vld [vmem:[%s6 + $0xf8] sm:$0xff]
      %v1093 = vld [vmem:[%s6 + $0x100] sm:$0xff]
      %v1094 = vld [vmem:[%s6 + $0x108] sm:$0xff]
      %v1095 = vld [vmem:[%s6 + $0x110] sm:$0xff]
      %v1096 = vld [vmem:[%s6 + $0x118] sm:$0xff]
      %v1097 = vld [vmem:[%s6 + $0x120] sm:$0xff]
      %v1098 = vld [vmem:[%s6 + $0x128] sm:$0xff]
      %v1099 = vld [vmem:[%s6 + $0x130] sm:$0xff]
      %v1100 = vld [vmem:[%s6 + $0x138] sm:$0xff]
      %v1101 = vld [vmem:[%s6 + $0x140] sm:$0xff]
      %v1102 = vld [vmem:[%s6 + $0x148] sm:$0xff]
      %v1103 = vld [vmem:[%s6 + $0x150] sm:$0xff]
      %v1104 = vld [vmem:[%s6 + $0x158] sm:$0xff]
      %v1105 = vld [vmem:[%s6 + $0x160] sm:$0xff]
      %v1106 = vld [vmem:[%s6 + $0x168] sm:$0xff]
      %v1107 = vld [vmem:[%s6 + $0x170] sm:$0xff]
      %v1108 = vld [vmem:[%s6 + $0x178] sm:$0xff]
      %v1109 = vld [vmem:[%s6 + $0x180] sm:$0xff]
      %v1110 = vld [vmem:[%s6 + $0x188] sm:$0xff]
      %v1111 = vld [vmem:[%s6 + $0x190] sm:$0xff]
      %v1112 = vld [vmem:[%s6 + $0x198] sm:$0xff]
      %v1113 = vld [vmem:[%s6 + $0x1a0] sm:$0xff]
      %v1114 = vld [vmem:[%s6 + $0x1a8] sm:$0xff]
      %v1115 = vld [vmem:[%s6 + $0x1b0] sm:$0xff]
      %v1116 = vld [vmem:[%s6 + $0x1b8] sm:$0xff]
      %v1117 = vld [vmem:[%s6 + $0x1c0] sm:$0xff]
      %v1118 = vld [vmem:[%s6 + $0x1c8] sm:$0xff]
      %v1119 = vld [vmem:[%s6 + $0x1d0] sm:$0xff]
      %v1120 = vld [vmem:[%s6 + $0x1d8] sm:$0xff]
      %v1121 = vld [vmem:[%s6 + $0x1e0] sm:$0xff]
      %v1122 = vld [vmem:[%s6 + $0x1e8] sm:$0xff]
      %v1123 = vld [vmem:[%s6 + $0x1f0] sm:$0xff]
      %v1124 = vld [vmem:[%s6 + $0x1f8] sm:$0xff]
      %v1125 = vld [vmem:[%s6 + $0x200] sm:$0xff]
      %v1126 = vld [vmem:[%s6 + $0x208] sm:$0xff]
      %v1127 = vld [vmem:[%s6 + $0x210] sm:$0xff]
      %v1128 = vld [vmem:[%s6 + $0x218] sm:$0xff]
      %v1129 = vld [vmem:[%s6 + $0x220] sm:$0xff]
      %v1130 = vld [vmem:[%s6 + $0x228] sm:$0xff]
      %v1131 = vld [vmem:[%s6 + $0x230] sm:$0xff]
      %v1132 = vld [vmem:[%s6 + $0x238] sm:$0xff]
      %v1133 = vld [vmem:[%s6 + $0x240] sm:$0xff]
      %v1134 = vld [vmem:[%s6 + $0x248] sm:$0xff]
      %v1135 = vld [vmem:[%s6 + $0x250] sm:$0xff]
      %v1136 = vld [vmem:[%s6 + $0x258] sm:$0xff]
      %v1137 = vld [vmem:[%s6 + $0x260] sm:$0xff]
      %v1138 = vld [vmem:[%s6 + $0x268] sm:$0xff]
      %v1139 = vld [vmem:[%s6 + $0x270] sm:$0xff]
      %v1140 = vld [vmem:[%s6 + $0x278] sm:$0xff]
      %v1141 = vld [vmem:[%s6 + $0x280] sm:$0xff]
      %v1142 = vld [vmem:[%s6 + $0x288] sm:$0xff]
      %v1143 = vld [vmem:[%s6 + $0x290] sm:$0xff]
      %v1144 = vld [vmem:[%s6 + $0x298] sm:$0xff]
      %v1145 = vld [vmem:[%s6 + $0x2a0] sm:$0xff]
      %v1146 = vld [vmem:[%s6 + $0x2a8] sm:$0xff]
      %v1147 = vld [vmem:[%s6 + $0x2b0] sm:$0xff]
      %v1148 = vld [vmem:[%s6 + $0x2b8] sm:$0xff]
      %v1149 = vld [vmem:[%s6 + $0x2c0] sm:$0xff]
      %v1150 = vld [vmem:[%s6 + $0x2c8] sm:$0xff]
      %v1151 = vld [vmem:[%s6 + $0x2d0] sm:$0xff]
      %v1152 = vld [vmem:[%s6 + $0x2d8] sm:$0xff]
      %v1153 = vld [vmem:[%s6 + $0x2e0] sm:$0xff]
      %v1154 = vld [vmem:[%s6 + $0x2e8] sm:$0xff]
      %v1155 = vld [vmem:[%s6 + $0x2f0] sm:$0xff]
      %v1156 = vld [vmem:[%s6 + $0x2f8] sm:$0xff]
      %v1157 = vld [vmem:[%s6 + $0x300] sm:$0xff]
      %v1158 = vld [vmem:[%s6 + $0x308] sm:$0xff]
      %v1159 = vld [vmem:[%s6 + $0x310] sm:$0xff]
      %v1160 = vld [vmem:[%s6 + $0x318] sm:$0xff]
      %v1161 = vld [vmem:[%s6 + $0x320] sm:$0xff]
      %v1162 = vld [vmem:[%s6 + $0x328] sm:$0xff]
      %v1163 = vld [vmem:[%s6 + $0x330] sm:$0xff]
      %v1164 = vld [vmem:[%s6 + $0x338] sm:$0xff]
      %v1165 = vld [vmem:[%s6 + $0x340] sm:$0xff]
      %v1166 = vld [vmem:[%s6 + $0x348] sm:$0xff]
      %v1167 = vld [vmem:[%s6 + $0x350] sm:$0xff]
      %v1168 = vld [vmem:[%s6 + $0x358] sm:$0xff]
      %v1169 = vld [vmem:[%s6 + $0x360] sm:$0xff]
      %v1170 = vld [vmem:[%s6 + $0x368] sm:$0xff]
      %v1171 = vld [vmem:[%s6 + $0x370] sm:$0xff]
      %v1172 = vld [vmem:[%s6 + $0x378] sm:$0xff]
      %v1173 = vld [vmem:[%s6 + $0x380] sm:$0xff]
      %v1174 = vld [vmem:[%s6 + $0x388] sm:$0xff]
      %v1175 = vld [vmem:[%s6 + $0x390] sm:$0xff]
      %v1176 = vld [vmem:[%s6 + $0x398] sm:$0xff]
      %v1177 = vld [vmem:[%s6 + $0x3a0] sm:$0xff]
      %v1178 = vld [vmem:[%s6 + $0x3a8] sm:$0xff]
      %v1179 = vld [vmem:[%s6 + $0x3b0] sm:$0xff]
      %v1180 = vld [vmem:[%s6 + $0x3b8] sm:$0xff]
      %v1181 = vld [vmem:[%s6 + $0x3c0] sm:$0xff]
      %v1182 = vld [vmem:[%s6 + $0x3c8] sm:$0xff]
      %v1183 = vld [vmem:[%s6 + $0x3d0] sm:$0xff]
      %v1184 = vld [vmem:[%s6 + $0x3d8] sm:$0xff]
      %v1185 = vld [vmem:[%s6 + $0x3e0] sm:$0xff]
      %v1186 = vld [vmem:[%s6 + $0x3e8] sm:$0xff]
      %v1187 = vld [vmem:[%s6 + $0x3f0] sm:$0xff]
      %v1188 = vld [vmem:[%s6 + $0x3f8] sm:$0xff]
      %s1189 = sld [smem:[#allocation2]]
      %v1190 = vstv %s1189
      %1191 = vmatprep.subr.mxu0 %v1062
      %1192 = vmatpush1.msra.mxu0 %v1061
      %1193 = vmatprep.subr.mxu0 %v1064
      %1194 = vmatpush1.msra.mxu0 %v1063
      %1195 = vmatprep.subr.mxu0 %v1066
      %1196 = vmatpush1.msra.mxu0 %v1065
      %1197 = vmatprep.subr.mxu0 %v1068
      %1198 = vmatpush1.msra.mxu0 %v1067
      %1199 = vmatprep.subr.mxu0 %v1070
      %1200 = vmatpush1.msra.mxu0 %v1069
      %1201 = vmatprep.subr.mxu0 %v1072
      %1202 = vmatpush1.msra.mxu0 %v1071
      %1203 = vmatprep.subr.mxu0 %v1074
      %1204 = vmatpush1.msra.mxu0 %v1073
      %1205 = vmatprep.subr.mxu0 %v1076
      %1206 = vmatpush1.msra.mxu0 %v1075
      %1207 = vmatprep.subr.mxu0 %v1078
      %1208 = vmatpush1.msra.mxu0 %v1077
      %1209 = vmatprep.subr.mxu0 %v1080
      %1210 = vmatpush1.msra.mxu0 %v1079
      %1211 = vmatprep.subr.mxu0 %v1082
      %1212 = vmatpush1.msra.mxu0 %v1081
      %1213 = vmatprep.subr.mxu0 %v1084
      %1214 = vmatpush1.msra.mxu0 %v1083
      %1215 = vmatprep.subr.mxu0 %v1086
      %1216 = vmatpush1.msra.mxu0 %v1085
      %1217 = vmatprep.subr.mxu0 %v1088
      %1218 = vmatpush1.msra.mxu0 %v1087
      %1219 = vmatprep.subr.mxu0 %v1090
      %1220 = vmatpush1.msra.mxu0 %v1089
      %1221 = vmatprep.subr.mxu0 %v1092
      %1222 = vmatpush1.msra.mxu0 %v1091
      %1223 = vmatprep.subr.mxu0 %v1094
      %1224 = vmatpush1.msra.mxu0 %v1093
      %1225 = vmatprep.subr.mxu0 %v1096
      %1226 = vmatpush1.msra.mxu0 %v1095
      %1227 = vmatprep.subr.mxu0 %v1098
      %1228 = vmatpush1.msra.mxu0 %v1097
      %1229 = vmatprep.subr.mxu0 %v1100
      %1230 = vmatpush1.msra.mxu0 %v1099
      %1231 = vmatprep.subr.mxu0 %v1102
      %1232 = vmatpush1.msra.mxu0 %v1101
      %1233 = vmatprep.subr.mxu0 %v1104
      %1234 = vmatpush1.msra.mxu0 %v1103
      %1235 = vmatprep.subr.mxu0 %v1106
      %1236 = vmatpush1.msra.mxu0 %v1105
      %1237 = vmatprep.subr.mxu0 %v1108
      %1238 = vmatpush1.msra.mxu0 %v1107
      %1239 = vmatprep.subr.mxu0 %v1110
      %1240 = vmatpush1.msra.mxu0 %v1109
      %1241 = vmatprep.subr.mxu0 %v1112
      %1242 = vmatpush1.msra.mxu0 %v1111
      %1243 = vmatprep.subr.mxu0 %v1114
      %1244 = vmatpush1.msra.mxu0 %v1113
      %1245 = vmatprep.subr.mxu0 %v1116
      %1246 = vmatpush1.msra.mxu0 %v1115
      %1247 = vmatprep.subr.mxu0 %v1118
      %1248 = vmatpush1.msra.mxu0 %v1117
      %1249 = vmatprep.subr.mxu0 %v1120
      %1250 = vmatpush1.msra.mxu0 %v1119
      %1251 = vmatprep.subr.mxu0 %v1122
      %1252 = vmatpush1.msra.mxu0 %v1121
      %1253 = vmatprep.subr.mxu0 %v1124
      %1254 = vmatpush1.msra.mxu0 %v1123
      %1255 = vmatprep.mubr.f32.mxu0 %v1050
      %1256 = vmatmul.mubr.f32.gmra.mrb[0].mxu0 %v1049
      %v1257 = vpop.f32.mrb[0].mxu0
      %v1258 = vadd.f32 %v1190, %v1257
      %v1259 = vpop.f32.mrb[0].mxu0
      %v1260 = vadd.f32 %v1190, %v1259
      %1261 = vdwg.mxu0
      %1262 = vmatprep.subr.mxu0 %v1126
      %1263 = vmatpush1.msra.mxu0 %v1125
      %1264 = vmatprep.subr.mxu0 %v1128
      %1265 = vmatpush1.msra.mxu0 %v1127
      %1266 = vmatprep.subr.mxu0 %v1130
      %1267 = vmatpush1.msra.mxu0 %v1129
      %1268 = vmatprep.subr.mxu0 %v1132
      %1269 = vmatpush1.msra.mxu0 %v1131
      %1270 = vmatprep.subr.mxu0 %v1134
      %1271 = vmatpush1.msra.mxu0 %v1133
      %1272 = vmatprep.subr.mxu0 %v1136
      %1273 = vmatpush1.msra.mxu0 %v1135
      %1274 = vmatprep.subr.mxu0 %v1138
      %1275 = vmatpush1.msra.mxu0 %v1137
      %1276 = vmatprep.subr.mxu0 %v1140
      %1277 = vmatpush1.msra.mxu0 %v1139
      %1278 = vmatprep.subr.mxu0 %v1142
      %1279 = vmatpush1.msra.mxu0 %v1141
      %1280 = vmatprep.subr.mxu0 %v1144
      %1281 = vmatpush1.msra.mxu0 %v1143
      %1282 = vmatprep.subr.mxu0 %v1146
      %1283 = vmatpush1.msra.mxu0 %v1145
      %1284 = vmatprep.subr.mxu0 %v1148
      %1285 = vmatpush1.msra.mxu0 %v1147
      %1286 = vmatprep.subr.mxu0 %v1150
      %1287 = vmatpush1.msra.mxu0 %v1149
      %1288 = vmatprep.subr.mxu0 %v1152
      %1289 = vmatpush1.msra.mxu0 %v1151
      %1290 = vmatprep.subr.mxu0 %v1154
      %1291 = vmatpush1.msra.mxu0 %v1153
      %1292 = vmatprep.subr.mxu0 %v1156
      %1293 = vmatpush1.msra.mxu0 %v1155
      %1294 = vmatprep.subr.mxu0 %v1158
      %1295 = vmatpush1.msra.mxu0 %v1157
      %1296 = vmatprep.subr.mxu0 %v1160
      %1297 = vmatpush1.msra.mxu0 %v1159
      %1298 = vmatprep.subr.mxu0 %v1162
      %1299 = vmatpush1.msra.mxu0 %v1161
      %1300 = vmatprep.subr.mxu0 %v1164
      %1301 = vmatpush1.msra.mxu0 %v1163
      %1302 = vmatprep.subr.mxu0 %v1166
      %1303 = vmatpush1.msra.mxu0 %v1165
      %1304 = vmatprep.subr.mxu0 %v1168
      %1305 = vmatpush1.msra.mxu0 %v1167
      %1306 = vmatprep.subr.mxu0 %v1170
      %1307 = vmatpush1.msra.mxu0 %v1169
      %1308 = vmatprep.subr.mxu0 %v1172
      %1309 = vmatpush1.msra.mxu0 %v1171
      %1310 = vmatprep.subr.mxu0 %v1174
      %1311 = vmatpush1.msra.mxu0 %v1173
      %1312 = vmatprep.subr.mxu0 %v1176
      %1313 = vmatpush1.msra.mxu0 %v1175
      %1314 = vmatprep.subr.mxu0 %v1178
      %1315 = vmatpush1.msra.mxu0 %v1177
      %1316 = vmatprep.subr.mxu0 %v1180
      %1317 = vmatpush1.msra.mxu0 %v1179
      %1318 = vmatprep.subr.mxu0 %v1182
      %1319 = vmatpush1.msra.mxu0 %v1181
      %1320 = vmatprep.subr.mxu0 %v1184
      %1321 = vmatpush1.msra.mxu0 %v1183
      %1322 = vmatprep.subr.mxu0 %v1186
      %1323 = vmatpush1.msra.mxu0 %v1185
      %1324 = vmatprep.subr.mxu0 %v1188
      %1325 = vmatpush1.msra.mxu0 %v1187
      %1326 = vmatprep.mubr.f32.mxu0 %v1058
      %1327 = vmatmul.mubr.f32.gmra.mrb[0].mxu0 %v1057
      %v1328 = vpop.f32.mrb[0].mxu0
      %v1329 = vadd.f32 %v1258, %v1328
      %v1330 = vpop.f32.mrb[0].mxu0
      %v1331 = vadd.f32 %v1260, %v1330
      %1332 = vdwg.mxu0
      %v1333 = vxor.u32 %v1329, 2147483648
      %v1334 = vxor.u32 %v1331, 2147483648
      %v1335 = vmul.f32 %v1333, 1.442695
      %v1336 = vpow.pop %v1335
      %v1337 = vmul.f32 %v1334, 1.442695
      %v1338 = vpow.pop %v1337
      %v1339 = vadd.f32 %v1336, 1.0
      %v1340 = vadd.f32 %v1338, 1.0
      %v1341 = vrcp.pop %v1339
      %v1342 = vmul.f32 1.0, %v1341
      %v1343 = vrcp.pop %v1340
      %v1344 = vmul.f32 1.0, %v1343
      %v1347 = vcombine.low %v1342, %v1344
      %v1349 = vunpack.c.l.s4 1966171168
      %v1350 = vunpack.c.0.s8 %v1349
      %v1351 = vlaneseq
      %v1352 = vshrl.u32 %v1351, 7
      %v1353 = vsub.s32 %v1350, %v1352
      %v1354 = vrot.slane %v1347, %v1353
      %v1355 = vcombine.high %v1354, %v1354
      %v1357 = vunpack.c.l.s4 1966171168
      %v1358 = vunpack.c.0.s8 %v1357
      %v1359 = vlaneseq
      %v1360 = vshrl.u32 %v1359, 7
      %v1361 = vsub.s32 %v1358, %v1360
      %v1362 = vrot.slane %v1354, %v1361
      %v1364 = vunpack.c.l.s4 1966171168
      %v1365 = vunpack.c.0.s8 %v1364
      %v1366 = vlaneseq
      %v1367 = vshrl.u32 %v1366, 7
      %v1368 = vsub.s32 %v1365, %v1367
      %v1369 = vrot.slane %v1355, %v1368
      %v1370 = vlaneseq
      %v1371 = vshrl.u32 %v1370, 7
      %v1372 = vsub.s32 0, %v1371
      %v1373 = vrot.slane %v1362, %v1372
      %v1374 = vlaneseq
      %v1375 = vshrl.u32 %v1374, 7
      %v1376 = vsub.s32 1, %v1375
      %v1377 = vrot.slane %v1362, %v1376
      %v1378 = vlaneseq
      %v1379 = vshrl.u32 %v1378, 7
      %v1380 = vsub.s32 0, %v1379
      %v1381 = vrot.slane %v1369, %v1380
      %v1382 = vlaneseq
      %v1383 = vshrl.u32 %v1382, 7
      %v1384 = vsub.s32 1, %v1383
      %v1385 = vrot.slane %v1369, %v1384
      %v1390 = vmul.f32 %v952, %v1373
      %v1391 = vmul.f32 %v953, %v1377
      %v1392 = vmul.f32 %v954, %v1373
      %v1393 = vmul.f32 %v955, %v1377
      %v1394 = vmul.f32 %v956, %v1373
      %v1395 = vmul.f32 %v957, %v1377
      %v1396 = vmul.f32 %v958, %v1373
      %v1397 = vmul.f32 %v959, %v1377
      %v1398 = vmul.f32 %v960, %v1381
      %v1399 = vmul.f32 %v961, %v1385
      %v1400 = vmul.f32 %v962, %v1381
      %v1401 = vmul.f32 %v963, %v1385
      %v1402 = vmul.f32 %v964, %v1381
      %v1403 = vmul.f32 %v965, %v1385
      %v1404 = vmul.f32 %v966, %v1381
      %v1405 = vmul.f32 %v967, %v1385
      %v1406 = vadd.f32 %v1390, %v348
      %v1407 = vadd.f32 %v1391, %v349
      %v1408 = vadd.f32 %v1392, %v350
      %v1409 = vadd.f32 %v1393, %v351
      %v1410 = vadd.f32 %v1394, %v352
      %v1411 = vadd.f32 %v1395, %v353
      %v1412 = vadd.f32 %v1396, %v354
      %v1413 = vadd.f32 %v1397, %v355
      %v1414 = vadd.f32 %v1398, %v356
      %v1415 = vadd.f32 %v1399, %v357
      %v1416 = vadd.f32 %v1400, %v358
      %v1417 = vadd.f32 %v1401, %v359
      %v1418 = vadd.f32 %v1402, %v360
      %v1419 = vadd.f32 %v1403, %v361
      %v1420 = vadd.f32 %v1404, %v362
      %v1421 = vadd.f32 %v1405, %v363
      %1422 = vst [vmem:[%s346] sm:$0xff] %v1406
      %1423 = vst [vmem:[%s346 + $0x8] sm:$0xff] %v1407
      %1424 = vst [vmem:[%s346 + $0x10] sm:$0xff] %v1408
      %1425 = vst [vmem:[%s346 + $0x18] sm:$0xff] %v1409
      %1426 = vst [vmem:[%s346 + $0x20] sm:$0xff] %v1410
      %1427 = vst [vmem:[%s346 + $0x28] sm:$0xff] %v1411
      %1428 = vst [vmem:[%s346 + $0x30] sm:$0xff] %v1412
      %1429 = vst [vmem:[%s346 + $0x38] sm:$0xff] %v1413
      %1430 = vst [vmem:[%s346 + $0x40] sm:$0xff] %v1414
      %1431 = vst [vmem:[%s346 + $0x48] sm:$0xff] %v1415
      %1432 = vst [vmem:[%s346 + $0x50] sm:$0xff] %v1416
      %1433 = vst [vmem:[%s346 + $0x58] sm:$0xff] %v1417
      %1434 = vst [vmem:[%s346 + $0x60] sm:$0xff] %v1418
      %1435 = vst [vmem:[%s346 + $0x68] sm:$0xff] %v1419
      %1436 = vst [vmem:[%s346 + $0x70] sm:$0xff] %v1420
      %1437 = vst [vmem:[%s346 + $0x78] sm:$0xff] %v1421
      %p1438 = scmp.lt.s32.totalorder %s20, 1
      %s1439 = scalar_select %p1438, %s20, 1
      %s1440 = smul.addr %s1439, 16
      %s1441 = smul.addr %s1440, 8
      %s1442 = scalar_lea.vmem %s8, %s1441
      // Predicated region
      $region53: #{lca11_forward.1} parent=51 // pred_check
        %p1443 = pneg %p221
      $region54: #{lca11_forward.1} parent=51 // pred_check_branch
        %1445 = sbr.rel (%p1443) target = $region56
      $region55: #{lca11_forward.1} parent=51 // pred_region
        _
      $region56: #{lca11_forward.1} parent=51 // pred_fallthru
        _
    $region52: #{lca11_forward.1} parent=5 // pred_fallthru
      _
    %p1446 = scmp.le.s32.totalorder 2, %s15
    // Predicated region
    $region57: #{lca11_forward.1} parent=5 // pred_check
      %p1447 = pneg %p1446
    $region58: #{lca11_forward.1} parent=5 // pred_check_branch
      %1449 = sbr.rel (%p1447) target = $region60
    $region59: #{lca11_forward.1} parent=5 // pred_region
      %s1450 = ssub.s32 %s15, 2
      // Predicated region
      $region61: #{lca11_forward.1} parent=59 // pred_check
        %p1451 = pneg %p227
      $region62: #{lca11_forward.1} parent=59 // pred_check_branch
        %1453 = sbr.rel (%p1451) target = $region64
      $region63: #{lca11_forward.1} parent=59 // pred_region
        %p1454 = scmp.lt.s32.totalorder %s21, 1
        %s1455 = scalar_select %p1454, %s21, 1
        %s1456 = smul.addr %s1455, 16
        %s1457 = smul.addr %s1456, 8
        %s1458 = scalar_lea.vmem %s8, %s1457
      $region64: #{lca11_forward.1} parent=59 // pred_fallthru
        _
    $region60: #{lca11_forward.1} parent=5 // pred_fallthru
      _
  $region6: #{lca11_forward.1} parent=0 // loop_footer
    %s19 = sadd.s32 1, %s15
  $region7: #{lca11_forward.1} parent=0 // loop_footer_branch
    %14 = sbr.rel target = $region3
  $region8: #{lca11_forward.1} parent=0 // loop_exit
    _

</llo_original>
